<compile_context>
chip_gen: v6e
topology: v6e:2x2x1
jax: 0.10.0
libtpu: 0.0.40
codegen_flags: <defaults>
</compile_context>

<pallas_src>
import jax
import jax.numpy as jnp
from jax import lax
from jax.experimental import pallas as pl
from jax.experimental.pallas import tpu as pltpu
import numpy as np

# Module dimensions (BioCNN defaults).  hidden1 = Linear(c2*4, h) forces the
# spatial size: conv1(3x3) -> (N,c1,4,4), conv2(3x3) -> (N,c2,2,2) => input 6x6.
IN_C, IN_H, IN_W = 1, 6, 6
C1, C2, HID = 32, 64, 18
K = 3
H1, W1 = IN_H - K + 1, IN_W - K + 1          # 4, 4
H2, W2 = H1 - K + 1, W1 - K + 1              # 2, 2
F_IN = IN_C * IN_H * IN_W                    # 36
F1 = C1 * H1 * W1                            # 512
F2 = C2 * H2 * W2                            # 256  == c2 * 4


def biocnn_kernel(x_ref, m1_ref, b1_ref, m2_ref, b2_ref, wh_ref, bh_ref, o_ref):
    """Fused conv1+relu, conv2+relu, linear+relu on one TN-sized batch slab.

    x_ref : (TN, F_IN) bf16  image pixels, batch-major (as produced by .view)
    m1_ref: (F1, F_IN) bf16  conv1 unrolled to a dense matrix
    b1_ref: (F1, 1)    f32   conv1 bias repeated per output position
    m2_ref: (F2, F1)   bf16  conv2 unrolled to a dense matrix
    b2_ref: (F2, 1)    f32
    wh_ref: (HID, F2)  bf16  hidden1 weight (torch layout: out x in)
    bh_ref: (HID, 1)   f32
    o_ref : (HID, TN)  f32   batch on the lane axis (lane-dense stores)
    """
    x = x_ref[...]                                            # (TN, F_IN) bf16

    # h1 = m1 @ x.T  (contract feature axes of both operands), f32 accumulate.
    h1 = lax.dot_general(
        m1_ref[...], x, (((1,), (1,)), ((), ())),
        preferred_element_type=jnp.float32)                   # (F1, TN)
    h1 = jnp.maximum(h1 + b1_ref[...], 0.0).astype(jnp.bfloat16)

    h2 = jnp.dot(m2_ref[...], h1,
                 preferred_element_type=jnp.float32)          # (F2, TN)
    h2 = jnp.maximum(h2 + b2_ref[...], 0.0).astype(jnp.bfloat16)

    out = jnp.dot(wh_ref[...], h2,
                  preferred_element_type=jnp.float32)         # (HID, TN)
    o_ref[...] = jnp.maximum(out + bh_ref[...], 0.0)


def _conv_as_matrix(w, in_c, in_h, in_w):
    """Dense M s.t. conv2d_valid(x, w).reshape(N,-1) == x.reshape(N,-1) @ M.

    Weight-only preprocessing (identity 'basis images' through the conv); no
    batch data touches this path.
    """
    k = in_c * in_h * in_w
    basis = jnp.eye(k, dtype=jnp.float32).reshape(k, in_c, in_h, in_w)
    out = lax.conv_general_dilated(
        basis, w.astype(jnp.float32), window_strides=(1, 1), padding="VALID",
        dimension_numbers=("NCHW", "OIHW", "NCHW"))
    return out.reshape(k, -1)                 # (in_feats, out_feats), NCHW flatten


def biocnn_forward(x, w1, b1, w2, b2, wh, bh):
    """x: (N, 1, 6, 6) NCHW; conv weights OIHW; wh: (HID, F2); biases 1-D."""
    N = x.shape[0]
    assert x.shape[1:] == (IN_C, IN_H, IN_W), \
        "BioCNN.hidden1 hard-codes c2*4 features => input must be (N,1,6,6)"

    # ---- weight preprocessing (data-independent), bf16 matmul operands ----
    m1 = _conv_as_matrix(w1, IN_C, IN_H, IN_W).T.astype(jnp.bfloat16)  # (F1, F_IN)
    m2 = _conv_as_matrix(w2, C1, H1, W1).T.astype(jnp.bfloat16)        # (F2, F1)
    whf = wh.astype(jnp.bfloat16)                                      # (HID, F2)
    b1e = jnp.repeat(b1.astype(jnp.float32), H1 * W1)[:, None]         # (F1, 1)
    b2e = jnp.repeat(b2.astype(jnp.float32), H2 * W2)[:, None]         # (F2, 1)
    bhe = bh.astype(jnp.float32)[:, None]                              # (HID, 1)

    # ---- batch tiling ----
    # TN multiple of 128 (lane-dense output), capped at 2048 to amortize the
    # per-step pipeline overhead, and chosen so that for N > 256 the grid has
    # >= 2 steps (so v7x megacore can shard the "parallel" batch axis).
    TN = min(2048, 128 * pl.cdiv(max(N, 1), 256))
    grid = (pl.cdiv(N, TN),)

    # Batch-major, no transpose and no padding in the wrapper; Pallas handles
    # the ragged last block (out-of-range lanes are masked on the output).
    x2d = x.reshape(N, F_IN).astype(jnp.bfloat16)                      # (N, F_IN)

    flops = 2 * (F1 * F_IN + F2 * F1 + HID * F2) * N
    bytes_accessed = (x2d.size * 2 + m1.size * 2 + m2.size * 2 + whf.size * 2
                      + b1e.size * 4 + b2e.size * 4 + bhe.size * 4
                      + N * HID * 4)

    out_t = pl.pallas_call(
        biocnn_kernel,
        out_shape=jax.ShapeDtypeStruct((HID, N), jnp.float32),
        grid=grid,
        in_specs=[
            pl.BlockSpec((TN, F_IN), lambda i: (i, 0)),   # x slab (batch-major)
            pl.BlockSpec((F1, F_IN), lambda i: (0, 0)),   # conv1 matrix (resident)
            pl.BlockSpec((F1, 1), lambda i: (0, 0)),
            pl.BlockSpec((F2, F1), lambda i: (0, 0)),     # conv2 matrix (resident)
            pl.BlockSpec((F2, 1), lambda i: (0, 0)),
            pl.BlockSpec((HID, F2), lambda i: (0, 0)),    # hidden1 weight
            pl.BlockSpec((HID, 1), lambda i: (0, 0)),
        ],
        out_specs=pl.BlockSpec((HID, TN), lambda i: (0, i)),
        compiler_params=pltpu.CompilerParams(
            dimension_semantics=("parallel",),
            vmem_limit_bytes=48 * 1024 * 1024),
        cost_estimate=pl.CostEstimate(
            flops=flops, transcendentals=0, bytes_accessed=bytes_accessed),
    )(x2d, m1, b1e, m2, b2e, whf, bhe)

    return out_t.T                                                     # (N, HID)


def reference_forward(x, w1, b1, w2, b2, wh, bh):
    """Pure-JAX f32 reference mirroring BioCNN.forward exactly."""
    a1 = lax.conv_general_dilated(
        x.astype(jnp.float32), w1.astype(jnp.float32), (1, 1), "VALID",
        dimension_numbers=("NCHW", "OIHW", "NCHW")) + b1.reshape(1, -1, 1, 1)
    a1 = jnp.maximum(a1, 0.0)
    a2 = lax.conv_general_dilated(
        a1, w2.astype(jnp.float32), (1, 1), "VALID",
        dimension_numbers=("NCHW", "OIHW", "NCHW")) + b2.reshape(1, -1, 1, 1)
    a2 = jnp.maximum(a2, 0.0)
    flat = a2.reshape(x.shape[0], -1)                                  # (N, F2)
    return jnp.maximum(flat @ wh.T + bh, 0.0)


if __name__ == "__main__":
    key = jax.random.PRNGKey(0)
    kx, k1, k1b, k2, k2b, kh, khb = jax.random.split(key, 7)

    N = 2
    x = jax.random.normal(kx, (N, IN_C, IN_H, IN_W), dtype=jnp.float32)

    def uinit(k, shape, fan_in):
        b = 1.0 / float(np.sqrt(fan_in))
        return jax.random.uniform(k, shape, jnp.float32, -b, b)

    # PyTorch-style uniform(-1/sqrt(fan_in), 1/sqrt(fan_in)) init.
    w1 = uinit(k1, (C1, IN_C, K, K), IN_C * K * K)
    b1 = uinit(k1b, (C1,), IN_C * K * K)
    w2 = uinit(k2, (C2, C1, K, K), C1 * K * K)
    b2 = uinit(k2b, (C2,), C1 * K * K)
    wh = uinit(kh, (HID, F2), F2)
    bh = uinit(khb, (HID,), F2)

    out = jax.block_until_ready(biocnn_forward(x, w1, b1, w2, b2, wh, bh))
    ref = jax.block_until_ready(reference_forward(x, w1, b1, w2, b2, wh, bh))

    assert out.shape == (N, HID)
    # bf16 matmul operands with f32 accumulation => looser tolerance vs f32 ref.
    np.testing.assert_allclose(np.asarray(out), np.asarray(ref), rtol=2e-2, atol=2e-2)
    print("KERNEL_OK")
</pallas_src>

<mosaic_0001>
module attributes {stable_mosaic.version = 11 : i64} {
  func.func @biocnn_kernel(%arg0: i32, %arg1: memref<128x36xbf16, #tpu.memory_space<vmem>>, %arg2: memref<512x36xbf16, #tpu.memory_space<vmem>>, %arg3: memref<512x1xf32, #tpu.memory_space<vmem>>, %arg4: memref<256x512xbf16, #tpu.memory_space<vmem>>, %arg5: memref<256x1xf32, #tpu.memory_space<vmem>>, %arg6: memref<18x256xbf16, #tpu.memory_space<vmem>>, %arg7: memref<18x1xf32, #tpu.memory_space<vmem>>, %arg8: memref<18x128xf32, #tpu.memory_space<vmem>>) attributes {dimension_semantics = [#tpu.dimension_semantics<parallel>], iteration_bounds = array<i64: 1>, scalar_prefetch = 0 : i64, scratch_operands = 0 : i64, tpu.core_type = #tpu.core_type<tc>, window_params = [{transform_indices = @transform_0, window_bounds = array<i64: 128, 36>}, {pipeline_mode = #tpu.pipeline_mode<synchronous>, transform_indices = @transform_1, window_bounds = array<i64: 512, 36>}, {pipeline_mode = #tpu.pipeline_mode<synchronous>, transform_indices = @transform_2, window_bounds = array<i64: 512, 1>}, {pipeline_mode = #tpu.pipeline_mode<synchronous>, transform_indices = @transform_3, window_bounds = array<i64: 256, 512>}, {pipeline_mode = #tpu.pipeline_mode<synchronous>, transform_indices = @transform_4, window_bounds = array<i64: 256, 1>}, {pipeline_mode = #tpu.pipeline_mode<synchronous>, transform_indices = @transform_5, window_bounds = array<i64: 18, 256>}, {pipeline_mode = #tpu.pipeline_mode<synchronous>, transform_indices = @transform_6, window_bounds = array<i64: 18, 1>}, {transform_indices = @transform_7, window_bounds = array<i64: 18, 128>}]} {
    %c0 = arith.constant 0 : index
    %c0_0 = arith.constant 0 : index
    %0 = vector.load %arg1[%c0, %c0_0] : memref<128x36xbf16, #tpu.memory_space<vmem>>, vector<128x36xbf16>
    %c0_1 = arith.constant 0 : index
    %c0_2 = arith.constant 0 : index
    %1 = vector.load %arg2[%c0_1, %c0_2] : memref<512x36xbf16, #tpu.memory_space<vmem>>, vector<512x36xbf16>
    %cst = arith.constant dense<0.000000e+00> : vector<512x128xf32>
    %2 = tpu.matmul %1, %0, %cst {dimension_numbers = #tpu.dot_dimension_numbers<[1], [1], [0], [0], [0, 0, 1, 0], [], []>} : vector<512x36xbf16>, vector<128x36xbf16>, vector<512x128xf32> -> vector<512x128xf32>
    %c0_3 = arith.constant 0 : index
    %c0_4 = arith.constant 0 : index
    %3 = vector.load %arg3[%c0_3, %c0_4] : memref<512x1xf32, #tpu.memory_space<vmem>>, vector<512x1xf32>
    %4 = vector.broadcast %3 : vector<512x1xf32> to vector<512x128xf32>
    %5 = arith.addf %2, %4 : vector<512x128xf32>
    %cst_5 = arith.constant 0.000000e+00 : f32
    %6 = vector.broadcast %cst_5 : f32 to vector<512x128xf32>
    %7 = arith.maximumf %5, %6 : vector<512x128xf32>
    %8 = arith.truncf %7 : vector<512x128xf32> to vector<512x128xbf16>
    %c0_6 = arith.constant 0 : index
    %c0_7 = arith.constant 0 : index
    %9 = vector.load %arg4[%c0_6, %c0_7] : memref<256x512xbf16, #tpu.memory_space<vmem>>, vector<256x512xbf16>
    %cst_8 = arith.constant dense<0.000000e+00> : vector<256x128xf32>
    %10 = tpu.matmul %9, %8, %cst_8 {dimension_numbers = #tpu.dot_dimension_numbers<[1], [0], [0], [1], [0, 0, 1, 1], [], []>} : vector<256x512xbf16>, vector<512x128xbf16>, vector<256x128xf32> -> vector<256x128xf32>
    %c0_9 = arith.constant 0 : index
    %c0_10 = arith.constant 0 : index
    %11 = vector.load %arg5[%c0_9, %c0_10] : memref<256x1xf32, #tpu.memory_space<vmem>>, vector<256x1xf32>
    %12 = vector.broadcast %11 : vector<256x1xf32> to vector<256x128xf32>
    %13 = arith.addf %10, %12 : vector<256x128xf32>
    %cst_11 = arith.constant 0.000000e+00 : f32
    %14 = vector.broadcast %cst_11 : f32 to vector<256x128xf32>
    %15 = arith.maximumf %13, %14 : vector<256x128xf32>
    %16 = arith.truncf %15 : vector<256x128xf32> to vector<256x128xbf16>
    %c0_12 = arith.constant 0 : index
    %c0_13 = arith.constant 0 : index
    %17 = vector.load %arg6[%c0_12, %c0_13] : memref<18x256xbf16, #tpu.memory_space<vmem>>, vector<18x256xbf16>
    %cst_14 = arith.constant dense<0.000000e+00> : vector<18x128xf32>
    %18 = tpu.matmul %17, %16, %cst_14 {dimension_numbers = #tpu.dot_dimension_numbers<[1], [0], [0], [1], [0, 0, 1, 1], [], []>} : vector<18x256xbf16>, vector<256x128xbf16>, vector<18x128xf32> -> vector<18x128xf32>
    %c0_15 = arith.constant 0 : index
    %c0_16 = arith.constant 0 : index
    %19 = vector.load %arg7[%c0_15, %c0_16] : memref<18x1xf32, #tpu.memory_space<vmem>>, vector<18x1xf32>
    %20 = vector.broadcast %19 : vector<18x1xf32> to vector<18x128xf32>
    %21 = arith.addf %18, %20 : vector<18x128xf32>
    %cst_17 = arith.constant 0.000000e+00 : f32
    %22 = vector.broadcast %cst_17 : f32 to vector<18x128xf32>
    %23 = arith.maximumf %21, %22 : vector<18x128xf32>
    %c0_18 = arith.constant 0 : index
    %c0_19 = arith.constant 0 : index
    %24 = vector.load %arg8[%c0_18, %c0_19] : memref<18x128xf32, #tpu.memory_space<vmem>>, vector<18x128xf32>
    tpu.vector_store %arg8[%c0_18, %c0_19], %23 {strides = array<i32>} : memref<18x128xf32, #tpu.memory_space<vmem>>, vector<18x128xf32>,
    return
  }
  func.func @transform_0(%arg0: i32) -> (i32, i32) {
    %c0_i32 = arith.constant 0 : i32
    %c0_i32_0 = arith.constant 0 : i32
    return %arg0, %c0_i32 : i32, i32
  }
  func.func @transform_1(%arg0: i32) -> (i32, i32) {
    %c0_i32 = arith.constant 0 : i32
    %c0_i32_0 = arith.constant 0 : i32
    %c0_i32_1 = arith.constant 0 : i32
    return %c0_i32, %c0_i32_0 : i32, i32
  }
  func.func @transform_2(%arg0: i32) -> (i32, i32) {
    %c0_i32 = arith.constant 0 : i32
    %c0_i32_0 = arith.constant 0 : i32
    %c0_i32_1 = arith.constant 0 : i32
    return %c0_i32, %c0_i32_0 : i32, i32
  }
  func.func @transform_3(%arg0: i32) -> (i32, i32) {
    %c0_i32 = arith.constant 0 : i32
    %c0_i32_0 = arith.constant 0 : i32
    %c0_i32_1 = arith.constant 0 : i32
    return %c0_i32, %c0_i32_0 : i32, i32
  }
  func.func @transform_4(%arg0: i32) -> (i32, i32) {
    %c0_i32 = arith.constant 0 : i32
    %c0_i32_0 = arith.constant 0 : i32
    %c0_i32_1 = arith.constant 0 : i32
    return %c0_i32, %c0_i32_0 : i32, i32
  }
  func.func @transform_5(%arg0: i32) -> (i32, i32) {
    %c0_i32 = arith.constant 0 : i32
    %c0_i32_0 = arith.constant 0 : i32
    %c0_i32_1 = arith.constant 0 : i32
    return %c0_i32, %c0_i32_0 : i32, i32
  }
  func.func @transform_6(%arg0: i32) -> (i32, i32) {
    %c0_i32 = arith.constant 0 : i32
    %c0_i32_0 = arith.constant 0 : i32
    %c0_i32_1 = arith.constant 0 : i32
    return %c0_i32, %c0_i32_0 : i32, i32
  }
  func.func @transform_7(%arg0: i32) -> (i32, i32) {
    %c0_i32 = arith.constant 0 : i32
    %c0_i32_0 = arith.constant 0 : i32
    return %c0_i32, %arg0 : i32, i32
  }
}

</mosaic_0001>

<llo_original>
// kernel: tpu_custom_call.1
$region0: #{tpu_custom_call.1}
  #allocation0 [shape = 'u32[]', space=smem, size = 0x4, offset = 0x4, fixed_abs, tag = 'smem constant byte address 0x4 - core index']
  #allocation1 [shape = 'u32[144,128]{1,0:T(1,128)}', space=vmem, size = 0x12000, scoped, tag = 'internal scratch']
  %s0 = inlined_call_operand.vmem [shape: bf16[2,36], index: 0, kind: input, shape index: {}]
  %s1 = inlined_call_operand.vmem [shape: bf16[512,36], index: 1, kind: input, shape index: {}]
  %s2 = inlined_call_operand.vmem [shape: f32[512,1], index: 2, kind: input, shape index: {}]
  %s3 = inlined_call_operand.vmem [shape: bf16[256,512], index: 3, kind: input, shape index: {}]
  %s4 = inlined_call_operand.vmem [shape: f32[256,1], index: 4, kind: input, shape index: {}]
  %s5 = inlined_call_operand.vmem [shape: bf16[18,256], index: 5, kind: input, shape index: {}]
  %s6 = inlined_call_operand.vmem [shape: f32[18,1], index: 6, kind: input, shape index: {}]
  %s7 = inlined_call_operand.vmem [shape: f32[18,2], index: 7, kind: output, shape index: {}]
  %s8 = sld [smem:[#allocation0]]
  $region38: #{tpu_custom_call.1} parent=0
    _
  %s10 = ssub.s32 1, %s8
  %s11 = scalar_select 0, %s10, %s8
  // Predicated region
  $region2: #{tpu_custom_call.1} parent=0 // pred_check
    _
  $region3: #{tpu_custom_call.1} parent=0 // pred_check_branch
    %13 = sbr.rel (0) target = $region5
  $region4: #{tpu_custom_call.1} parent=0 // pred_region
    _
  $region5: #{tpu_custom_call.1} parent=0 // pred_fallthru
    _
  // Predicated region
  $region6: #{tpu_custom_call.1} parent=0 // pred_check
    _
  $region7: #{tpu_custom_call.1} parent=0 // pred_check_branch
    %15 = sbr.rel (0) target = $region9
  $region8: #{tpu_custom_call.1} parent=0 // pred_region
    _
  $region9: #{tpu_custom_call.1} parent=0 // pred_fallthru
    _
  // Predicated region
  $region10: #{tpu_custom_call.1} parent=0 // pred_check
    _
  $region11: #{tpu_custom_call.1} parent=0 // pred_check_branch
    %17 = sbr.rel (0) target = $region13
  $region12: #{tpu_custom_call.1} parent=0 // pred_region
    _
  $region13: #{tpu_custom_call.1} parent=0 // pred_fallthru
    _
  // Predicated region
  $region14: #{tpu_custom_call.1} parent=0 // pred_check
    _
  $region15: #{tpu_custom_call.1} parent=0 // pred_check_branch
    %19 = sbr.rel (0) target = $region17
  $region16: #{tpu_custom_call.1} parent=0 // pred_region
    _
  $region17: #{tpu_custom_call.1} parent=0 // pred_fallthru
    _
  // Predicated region
  $region18: #{tpu_custom_call.1} parent=0 // pred_check
    _
  $region19: #{tpu_custom_call.1} parent=0 // pred_check_branch
    %21 = sbr.rel (0) target = $region21
  $region20: #{tpu_custom_call.1} parent=0 // pred_region
    _
  $region21: #{tpu_custom_call.1} parent=0 // pred_fallthru
    _
  // Predicated region
  $region22: #{tpu_custom_call.1} parent=0 // pred_check
    _
  $region23: #{tpu_custom_call.1} parent=0 // pred_check_branch
    %23 = sbr.rel (0) target = $region25
  $region24: #{tpu_custom_call.1} parent=0 // pred_region
    _
  $region25: #{tpu_custom_call.1} parent=0 // pred_fallthru
    _
  // Predicated region
  $region26: #{tpu_custom_call.1} parent=0 // pred_check
    _
  $region27: #{tpu_custom_call.1} parent=0 // pred_check_branch
    %25 = sbr.rel (0) target = $region29
  $region28: #{tpu_custom_call.1} parent=0 // pred_region
    _
  $region29: #{tpu_custom_call.1} parent=0 // pred_fallthru
    _
  %v27 = vld [vmem:[%s0] sm:$0x1]
  %v28 = vld [vmem:[%s0 + $0x1] sm:$0x1]
  %v29 = vld [vmem:[%s0 + $0x2] sm:$0x1]
  %v30 = vld [vmem:[%s0 + $0x3] sm:$0x1]
  %v31 = vld [vmem:[%s0 + $0x4] sm:$0x1]
  %v32 = vld [vmem:[%s0 + $0x5] sm:$0x1]
  %v33 = vld [vmem:[%s0 + $0x6] sm:$0x1]
  %v34 = vld [vmem:[%s0 + $0x7] sm:$0x1]
  %v35 = vld [vmem:[%s0 + $0x8] sm:$0x1]
  %v36 = vld [vmem:[%s0 + $0x9] sm:$0x1]
  %v37 = vld [vmem:[%s0 + $0xa] sm:$0x1]
  %v38 = vld [vmem:[%s0 + $0xb] sm:$0x1]
  %v39 = vld [vmem:[%s0 + $0xc] sm:$0x1]
  %v40 = vld [vmem:[%s0 + $0xd] sm:$0x1]
  %v41 = vld [vmem:[%s0 + $0xe] sm:$0x1]
  %v42 = vld [vmem:[%s0 + $0xf] sm:$0x1]
  %v43 = vld [vmem:[%s0 + $0x10] sm:$0x1]
  %v44 = vld [vmem:[%s0 + $0x11] sm:$0x1]
  %v45 = vld [vmem:[%s0 + $0x12] sm:$0x1]
  %v46 = vld [vmem:[%s0 + $0x13] sm:$0x1]
  %v47 = vld [vmem:[%s0 + $0x14] sm:$0x1]
  %v48 = vld [vmem:[%s0 + $0x15] sm:$0x1]
  %v49 = vld [vmem:[%s0 + $0x16] sm:$0x1]
  %v50 = vld [vmem:[%s0 + $0x17] sm:$0x1]
  %v51 = vld [vmem:[%s0 + $0x18] sm:$0x1]
  %v52 = vld [vmem:[%s0 + $0x19] sm:$0x1]
  %v53 = vld [vmem:[%s0 + $0x1a] sm:$0x1]
  %v54 = vld [vmem:[%s0 + $0x1b] sm:$0x1]
  %v55 = vld [vmem:[%s0 + $0x1c] sm:$0x1]
  %v56 = vld [vmem:[%s0 + $0x1d] sm:$0x1]
  %v57 = vld [vmem:[%s0 + $0x1e] sm:$0x1]
  %v58 = vld [vmem:[%s0 + $0x1f] sm:$0x1]
  %v59 = vld [vmem:[%s0 + $0x20] sm:$0x1]
  %v60 = vld [vmem:[%s0 + $0x21] sm:$0x1]
  %v61 = vld [vmem:[%s0 + $0x22] sm:$0x1]
  %v62 = vld [vmem:[%s0 + $0x23] sm:$0x1]
  %v63 = vld [vmem:[%s0 + $0x24] sm:$0x1]
  %v64 = vld [vmem:[%s0 + $0x25] sm:$0x1]
  %v65 = vld [vmem:[%s0 + $0x26] sm:$0x1]
  %v66 = vld [vmem:[%s0 + $0x27] sm:$0x1]
  %v67 = vld [vmem:[%s0 + $0x28] sm:$0x1]
  %v68 = vld [vmem:[%s0 + $0x29] sm:$0x1]
  %v69 = vld [vmem:[%s0 + $0x2a] sm:$0x1]
  %v70 = vld [vmem:[%s0 + $0x2b] sm:$0x1]
  %v71 = vld [vmem:[%s0 + $0x2c] sm:$0x1]
  %v72 = vld [vmem:[%s0 + $0x2d] sm:$0x1]
  %v73 = vld [vmem:[%s0 + $0x2e] sm:$0x1]
  %v74 = vld [vmem:[%s0 + $0x2f] sm:$0x1]
  %v75 = vld [vmem:[%s0 + $0x30] sm:$0x1]
  %v76 = vld [vmem:[%s0 + $0x31] sm:$0x1]
  %v77 = vld [vmem:[%s0 + $0x32] sm:$0x1]
  %v78 = vld [vmem:[%s0 + $0x33] sm:$0x1]
  %v79 = vld [vmem:[%s0 + $0x34] sm:$0x1]
  %v80 = vld [vmem:[%s0 + $0x35] sm:$0x1]
  %v81 = vld [vmem:[%s0 + $0x36] sm:$0x1]
  %v82 = vld [vmem:[%s0 + $0x37] sm:$0x1]
  %v83 = vld [vmem:[%s0 + $0x38] sm:$0x1]
  %v84 = vld [vmem:[%s0 + $0x39] sm:$0x1]
  %v85 = vld [vmem:[%s0 + $0x3a] sm:$0x1]
  %v86 = vld [vmem:[%s0 + $0x3b] sm:$0x1]
  %v87 = vld [vmem:[%s0 + $0x3c] sm:$0x1]
  %v88 = vld [vmem:[%s0 + $0x3d] sm:$0x1]
  %v89 = vld [vmem:[%s0 + $0x3e] sm:$0x1]
  %v90 = vld [vmem:[%s0 + $0x3f] sm:$0x1]
  %v91 = vld [vmem:[%s1] sm:$0xf]
  %v92 = vld [vmem:[%s1 + $0x4] sm:$0xf]
  %v93 = vld [vmem:[%s1 + $0x8] sm:$0xf]
  %v94 = vld [vmem:[%s1 + $0xc] sm:$0xf]
  %v95 = vld [vmem:[%s1 + $0x10] sm:$0xf]
  %v96 = vld [vmem:[%s1 + $0x14] sm:$0xf]
  %v97 = vld [vmem:[%s1 + $0x18] sm:$0xf]
  %v98 = vld [vmem:[%s1 + $0x1c] sm:$0xf]
  %v99 = vld [vmem:[%s1 + $0x20] sm:$0xf]
  %v100 = vld [vmem:[%s1 + $0x24] sm:$0xf]
  %v101 = vld [vmem:[%s1 + $0x28] sm:$0xf]
  %v102 = vld [vmem:[%s1 + $0x2c] sm:$0xf]
  %v103 = vld [vmem:[%s1 + $0x30] sm:$0xf]
  %v104 = vld [vmem:[%s1 + $0x34] sm:$0xf]
  %v105 = vld [vmem:[%s1 + $0x38] sm:$0xf]
  %v106 = vld [vmem:[%s1 + $0x3c] sm:$0xf]
  %v107 = vld [vmem:[%s1 + $0x40] sm:$0xf]
  %v108 = vld [vmem:[%s1 + $0x44] sm:$0xf]
  %v109 = vld [vmem:[%s1 + $0x48] sm:$0xf]
  %v110 = vld [vmem:[%s1 + $0x4c] sm:$0xf]
  %v111 = vld [vmem:[%s1 + $0x50] sm:$0xf]
  %v112 = vld [vmem:[%s1 + $0x54] sm:$0xf]
  %v113 = vld [vmem:[%s1 + $0x58] sm:$0xf]
  %v114 = vld [vmem:[%s1 + $0x5c] sm:$0xf]
  %v115 = vld [vmem:[%s1 + $0x60] sm:$0xf]
  %v116 = vld [vmem:[%s1 + $0x64] sm:$0xf]
  %v117 = vld [vmem:[%s1 + $0x68] sm:$0xf]
  %v118 = vld [vmem:[%s1 + $0x6c] sm:$0xf]
  %v119 = vld [vmem:[%s1 + $0x70] sm:$0xf]
  %v120 = vld [vmem:[%s1 + $0x74] sm:$0xf]
  %v121 = vld [vmem:[%s1 + $0x78] sm:$0xf]
  %v122 = vld [vmem:[%s1 + $0x7c] sm:$0xf]
  %v123 = vld [vmem:[%s1 + $0x80] sm:$0xf]
  %v124 = vld [vmem:[%s1 + $0x84] sm:$0xf]
  %v125 = vld [vmem:[%s1 + $0x88] sm:$0xf]
  %v126 = vld [vmem:[%s1 + $0x8c] sm:$0xf]
  %v127 = vld [vmem:[%s1 + $0x90] sm:$0xf]
  %v128 = vld [vmem:[%s1 + $0x94] sm:$0xf]
  %v129 = vld [vmem:[%s1 + $0x98] sm:$0xf]
  %v130 = vld [vmem:[%s1 + $0x9c] sm:$0xf]
  %v131 = vld [vmem:[%s1 + $0xa0] sm:$0xf]
  %v132 = vld [vmem:[%s1 + $0xa4] sm:$0xf]
  %v133 = vld [vmem:[%s1 + $0xa8] sm:$0xf]
  %v134 = vld [vmem:[%s1 + $0xac] sm:$0xf]
  %v135 = vld [vmem:[%s1 + $0xb0] sm:$0xf]
  %v136 = vld [vmem:[%s1 + $0xb4] sm:$0xf]
  %v137 = vld [vmem:[%s1 + $0xb8] sm:$0xf]
  %v138 = vld [vmem:[%s1 + $0xbc] sm:$0xf]
  %v139 = vld [vmem:[%s1 + $0xc0] sm:$0xf]
  %v140 = vld [vmem:[%s1 + $0xc4] sm:$0xf]
  %v141 = vld [vmem:[%s1 + $0xc8] sm:$0xf]
  %v142 = vld [vmem:[%s1 + $0xcc] sm:$0xf]
  %v143 = vld [vmem:[%s1 + $0xd0] sm:$0xf]
  %v144 = vld [vmem:[%s1 + $0xd4] sm:$0xf]
  %v145 = vld [vmem:[%s1 + $0xd8] sm:$0xf]
  %v146 = vld [vmem:[%s1 + $0xdc] sm:$0xf]
  %v147 = vld [vmem:[%s1 + $0xe0] sm:$0xf]
  %v148 = vld [vmem:[%s1 + $0xe4] sm:$0xf]
  %v149 = vld [vmem:[%s1 + $0xe8] sm:$0xf]
  %v150 = vld [vmem:[%s1 + $0xec] sm:$0xf]
  %v151 = vld [vmem:[%s1 + $0xf0] sm:$0xf]
  %v152 = vld [vmem:[%s1 + $0xf4] sm:$0xf]
  %v153 = vld [vmem:[%s1 + $0xf8] sm:$0xf]
  %v154 = vld [vmem:[%s1 + $0xfc] sm:$0xf]
  %v155 = vld [vmem:[%s2] sm:$0xff]
  %v156 = vld [vmem:[%s2 + $0x8] sm:$0xff]
  %v157 = vld [vmem:[%s2 + $0x10] sm:$0xff]
  %v158 = vld [vmem:[%s2 + $0x18] sm:$0xff]
  %v159 = vld [vmem:[%s2 + $0x20] sm:$0xff]
  %v160 = vld [vmem:[%s2 + $0x28] sm:$0xff]
  %v161 = vld [vmem:[%s2 + $0x30] sm:$0xff]
  %v162 = vld [vmem:[%s2 + $0x38] sm:$0xff]
  %v163 = vld [vmem:[%s2 + $0x40] sm:$0xff]
  %v164 = vld [vmem:[%s2 + $0x48] sm:$0xff]
  %v165 = vld [vmem:[%s2 + $0x50] sm:$0xff]
  %v166 = vld [vmem:[%s2 + $0x58] sm:$0xff]
  %v167 = vld [vmem:[%s2 + $0x60] sm:$0xff]
  %v168 = vld [vmem:[%s2 + $0x68] sm:$0xff]
  %v169 = vld [vmem:[%s2 + $0x70] sm:$0xff]
  %v170 = vld [vmem:[%s2 + $0x78] sm:$0xff]
  %v171 = vld [vmem:[%s2 + $0x80] sm:$0xff]
  %v172 = vld [vmem:[%s2 + $0x88] sm:$0xff]
  %v173 = vld [vmem:[%s2 + $0x90] sm:$0xff]
  %v174 = vld [vmem:[%s2 + $0x98] sm:$0xff]
  %v175 = vld [vmem:[%s2 + $0xa0] sm:$0xff]
  %v176 = vld [vmem:[%s2 + $0xa8] sm:$0xff]
  %v177 = vld [vmem:[%s2 + $0xb0] sm:$0xff]
  %v178 = vld [vmem:[%s2 + $0xb8] sm:$0xff]
  %v179 = vld [vmem:[%s2 + $0xc0] sm:$0xff]
  %v180 = vld [vmem:[%s2 + $0xc8] sm:$0xff]
  %v181 = vld [vmem:[%s2 + $0xd0] sm:$0xff]
  %v182 = vld [vmem:[%s2 + $0xd8] sm:$0xff]
  %v183 = vld [vmem:[%s2 + $0xe0] sm:$0xff]
  %v184 = vld [vmem:[%s2 + $0xe8] sm:$0xff]
  %v185 = vld [vmem:[%s2 + $0xf0] sm:$0xff]
  %v186 = vld [vmem:[%s2 + $0xf8] sm:$0xff]
  %v187 = vld [vmem:[%s2 + $0x100] sm:$0xff]
  %v188 = vld [vmem:[%s2 + $0x108] sm:$0xff]
  %v189 = vld [vmem:[%s2 + $0x110] sm:$0xff]
  %v190 = vld [vmem:[%s2 + $0x118] sm:$0xff]
  %v191 = vld [vmem:[%s2 + $0x120] sm:$0xff]
  %v192 = vld [vmem:[%s2 + $0x128] sm:$0xff]
  %v193 = vld [vmem:[%s2 + $0x130] sm:$0xff]
  %v194 = vld [vmem:[%s2 + $0x138] sm:$0xff]
  %v195 = vld [vmem:[%s2 + $0x140] sm:$0xff]
  %v196 = vld [vmem:[%s2 + $0x148] sm:$0xff]
  %v197 = vld [vmem:[%s2 + $0x150] sm:$0xff]
  %v198 = vld [vmem:[%s2 + $0x158] sm:$0xff]
  %v199 = vld [vmem:[%s2 + $0x160] sm:$0xff]
  %v200 = vld [vmem:[%s2 + $0x168] sm:$0xff]
  %v201 = vld [vmem:[%s2 + $0x170] sm:$0xff]
  %v202 = vld [vmem:[%s2 + $0x178] sm:$0xff]
  %v203 = vld [vmem:[%s2 + $0x180] sm:$0xff]
  %v204 = vld [vmem:[%s2 + $0x188] sm:$0xff]
  %v205 = vld [vmem:[%s2 + $0x190] sm:$0xff]
  %v206 = vld [vmem:[%s2 + $0x198] sm:$0xff]
  %v207 = vld [vmem:[%s2 + $0x1a0] sm:$0xff]
  %v208 = vld [vmem:[%s2 + $0x1a8] sm:$0xff]
  %v209 = vld [vmem:[%s2 + $0x1b0] sm:$0xff]
  %v210 = vld [vmem:[%s2 + $0x1b8] sm:$0xff]
  %v211 = vld [vmem:[%s2 + $0x1c0] sm:$0xff]
  %v212 = vld [vmem:[%s2 + $0x1c8] sm:$0xff]
  %v213 = vld [vmem:[%s2 + $0x1d0] sm:$0xff]
  %v214 = vld [vmem:[%s2 + $0x1d8] sm:$0xff]
  %v215 = vld [vmem:[%s2 + $0x1e0] sm:$0xff]
  %v216 = vld [vmem:[%s2 + $0x1e8] sm:$0xff]
  %v217 = vld [vmem:[%s2 + $0x1f0] sm:$0xff]
  %v218 = vld [vmem:[%s2 + $0x1f8] sm:$0xff]
  %220 = vset.pattern.permute.xlu0 0
  %221 = vperm.xlu0 %220, %v155
  %v222 = vpop.permute.xlu0 %221
  %225 = vset.pattern.permute.xlu0 0
  %226 = vperm.xlu0 %225, %v156
  %v227 = vpop.permute.xlu0 %226
  %230 = vset.pattern.permute.xlu0 0
  %231 = vperm.xlu0 %230, %v157
  %v232 = vpop.permute.xlu0 %231
  %235 = vset.pattern.permute.xlu0 0
  %236 = vperm.xlu0 %235, %v158
  %v237 = vpop.permute.xlu0 %236
  %240 = vset.pattern.permute.xlu0 0
  %241 = vperm.xlu0 %240, %v159
  %v242 = vpop.permute.xlu0 %241
  %245 = vset.pattern.permute.xlu0 0
  %246 = vperm.xlu0 %245, %v160
  %v247 = vpop.permute.xlu0 %246
  %250 = vset.pattern.permute.xlu0 0
  %251 = vperm.xlu0 %250, %v161
  %v252 = vpop.permute.xlu0 %251
  %255 = vset.pattern.permute.xlu0 0
  %256 = vperm.xlu0 %255, %v162
  %v257 = vpop.permute.xlu0 %256
  %260 = vset.pattern.permute.xlu0 0
  %261 = vperm.xlu0 %260, %v163
  %v262 = vpop.permute.xlu0 %261
  %265 = vset.pattern.permute.xlu0 0
  %266 = vperm.xlu0 %265, %v164
  %v267 = vpop.permute.xlu0 %266
  %270 = vset.pattern.permute.xlu0 0
  %271 = vperm.xlu0 %270, %v165
  %v272 = vpop.permute.xlu0 %271
  %275 = vset.pattern.permute.xlu0 0
  %276 = vperm.xlu0 %275, %v166
  %v277 = vpop.permute.xlu0 %276
  %280 = vset.pattern.permute.xlu0 0
  %281 = vperm.xlu0 %280, %v167
  %v282 = vpop.permute.xlu0 %281
  %285 = vset.pattern.permute.xlu0 0
  %286 = vperm.xlu0 %285, %v168
  %v287 = vpop.permute.xlu0 %286
  %290 = vset.pattern.permute.xlu0 0
  %291 = vperm.xlu0 %290, %v169
  %v292 = vpop.permute.xlu0 %291
  %295 = vset.pattern.permute.xlu0 0
  %296 = vperm.xlu0 %295, %v170
  %v297 = vpop.permute.xlu0 %296
  %300 = vset.pattern.permute.xlu0 0
  %301 = vperm.xlu0 %300, %v171
  %v302 = vpop.permute.xlu0 %301
  %305 = vset.pattern.permute.xlu0 0
  %306 = vperm.xlu0 %305, %v172
  %v307 = vpop.permute.xlu0 %306
  %310 = vset.pattern.permute.xlu0 0
  %311 = vperm.xlu0 %310, %v173
  %v312 = vpop.permute.xlu0 %311
  %315 = vset.pattern.permute.xlu0 0
  %316 = vperm.xlu0 %315, %v174
  %v317 = vpop.permute.xlu0 %316
  %320 = vset.pattern.permute.xlu0 0
  %321 = vperm.xlu0 %320, %v175
  %v322 = vpop.permute.xlu0 %321
  %325 = vset.pattern.permute.xlu0 0
  %326 = vperm.xlu0 %325, %v176
  %v327 = vpop.permute.xlu0 %326
  %330 = vset.pattern.permute.xlu0 0
  %331 = vperm.xlu0 %330, %v177
  %v332 = vpop.permute.xlu0 %331
  %335 = vset.pattern.permute.xlu0 0
  %336 = vperm.xlu0 %335, %v178
  %v337 = vpop.permute.xlu0 %336
  %340 = vset.pattern.permute.xlu0 0
  %341 = vperm.xlu0 %340, %v179
  %v342 = vpop.permute.xlu0 %341
  %345 = vset.pattern.permute.xlu0 0
  %346 = vperm.xlu0 %345, %v180
  %v347 = vpop.permute.xlu0 %346
  %350 = vset.pattern.permute.xlu0 0
  %351 = vperm.xlu0 %350, %v181
  %v352 = vpop.permute.xlu0 %351
  %355 = vset.pattern.permute.xlu0 0
  %356 = vperm.xlu0 %355, %v182
  %v357 = vpop.permute.xlu0 %356
  %360 = vset.pattern.permute.xlu0 0
  %361 = vperm.xlu0 %360, %v183
  %v362 = vpop.permute.xlu0 %361
  %365 = vset.pattern.permute.xlu0 0
  %366 = vperm.xlu0 %365, %v184
  %v367 = vpop.permute.xlu0 %366
  %370 = vset.pattern.permute.xlu0 0
  %371 = vperm.xlu0 %370, %v185
  %v372 = vpop.permute.xlu0 %371
  %375 = vset.pattern.permute.xlu0 0
  %376 = vperm.xlu0 %375, %v186
  %v377 = vpop.permute.xlu0 %376
  %380 = vset.pattern.permute.xlu0 0
  %381 = vperm.xlu0 %380, %v187
  %v382 = vpop.permute.xlu0 %381
  %385 = vset.pattern.permute.xlu0 0
  %386 = vperm.xlu0 %385, %v188
  %v387 = vpop.permute.xlu0 %386
  %390 = vset.pattern.permute.xlu0 0
  %391 = vperm.xlu0 %390, %v189
  %v392 = vpop.permute.xlu0 %391
  %395 = vset.pattern.permute.xlu0 0
  %396 = vperm.xlu0 %395, %v190
  %v397 = vpop.permute.xlu0 %396
  %400 = vset.pattern.permute.xlu0 0
  %401 = vperm.xlu0 %400, %v191
  %v402 = vpop.permute.xlu0 %401
  %405 = vset.pattern.permute.xlu0 0
  %406 = vperm.xlu0 %405, %v192
  %v407 = vpop.permute.xlu0 %406
  %410 = vset.pattern.permute.xlu0 0
  %411 = vperm.xlu0 %410, %v193
  %v412 = vpop.permute.xlu0 %411
  %415 = vset.pattern.permute.xlu0 0
  %416 = vperm.xlu0 %415, %v194
  %v417 = vpop.permute.xlu0 %416
  %420 = vset.pattern.permute.xlu0 0
  %421 = vperm.xlu0 %420, %v195
  %v422 = vpop.permute.xlu0 %421
  %425 = vset.pattern.permute.xlu0 0
  %426 = vperm.xlu0 %425, %v196
  %v427 = vpop.permute.xlu0 %426
  %430 = vset.pattern.permute.xlu0 0
  %431 = vperm.xlu0 %430, %v197
  %v432 = vpop.permute.xlu0 %431
  %435 = vset.pattern.permute.xlu0 0
  %436 = vperm.xlu0 %435, %v198
  %v437 = vpop.permute.xlu0 %436
  %440 = vset.pattern.permute.xlu0 0
  %441 = vperm.xlu0 %440, %v199
  %v442 = vpop.permute.xlu0 %441
  %445 = vset.pattern.permute.xlu0 0
  %446 = vperm.xlu0 %445, %v200
  %v447 = vpop.permute.xlu0 %446
  %450 = vset.pattern.permute.xlu0 0
  %451 = vperm.xlu0 %450, %v201
  %v452 = vpop.permute.xlu0 %451
  %455 = vset.pattern.permute.xlu0 0
  %456 = vperm.xlu0 %455, %v202
  %v457 = vpop.permute.xlu0 %456
  %460 = vset.pattern.permute.xlu0 0
  %461 = vperm.xlu0 %460, %v203
  %v462 = vpop.permute.xlu0 %461
  %465 = vset.pattern.permute.xlu0 0
  %466 = vperm.xlu0 %465, %v204
  %v467 = vpop.permute.xlu0 %466
  %470 = vset.pattern.permute.xlu0 0
  %471 = vperm.xlu0 %470, %v205
  %v472 = vpop.permute.xlu0 %471
  %475 = vset.pattern.permute.xlu0 0
  %476 = vperm.xlu0 %475, %v206
  %v477 = vpop.permute.xlu0 %476
  %480 = vset.pattern.permute.xlu0 0
  %481 = vperm.xlu0 %480, %v207
  %v482 = vpop.permute.xlu0 %481
  %485 = vset.pattern.permute.xlu0 0
  %486 = vperm.xlu0 %485, %v208
  %v487 = vpop.permute.xlu0 %486
  %490 = vset.pattern.permute.xlu0 0
  %491 = vperm.xlu0 %490, %v209
  %v492 = vpop.permute.xlu0 %491
  %495 = vset.pattern.permute.xlu0 0
  %496 = vperm.xlu0 %495, %v210
  %v497 = vpop.permute.xlu0 %496
  %500 = vset.pattern.permute.xlu0 0
  %501 = vperm.xlu0 %500, %v211
  %v502 = vpop.permute.xlu0 %501
  %505 = vset.pattern.permute.xlu0 0
  %506 = vperm.xlu0 %505, %v212
  %v507 = vpop.permute.xlu0 %506
  %510 = vset.pattern.permute.xlu0 0
  %511 = vperm.xlu0 %510, %v213
  %v512 = vpop.permute.xlu0 %511
  %515 = vset.pattern.permute.xlu0 0
  %516 = vperm.xlu0 %515, %v214
  %v517 = vpop.permute.xlu0 %516
  %520 = vset.pattern.permute.xlu0 0
  %521 = vperm.xlu0 %520, %v215
  %v522 = vpop.permute.xlu0 %521
  %525 = vset.pattern.permute.xlu0 0
  %526 = vperm.xlu0 %525, %v216
  %v527 = vpop.permute.xlu0 %526
  %530 = vset.pattern.permute.xlu0 0
  %531 = vperm.xlu0 %530, %v217
  %v532 = vpop.permute.xlu0 %531
  %535 = vset.pattern.permute.xlu0 0
  %536 = vperm.xlu0 %535, %v218
  %v537 = vpop.permute.xlu0 %536
  %v603 = vunpack.c.l.b16 %v91
  %v604 = vunpack.c.l.b16 %v92
  %v605 = vunpack.c.l.b16 %v93
  %v606 = vunpack.c.l.b16 %v94
  %v607 = vunpack.c.l.b16 %v95
  %v608 = vunpack.c.l.b16 %v96
  %v609 = vunpack.c.l.b16 %v97
  %v610 = vunpack.c.l.b16 %v98
  %v611 = vunpack.c.l.b16 %v99
  %v612 = vunpack.c.l.b16 %v100
  %v613 = vunpack.c.l.b16 %v101
  %v614 = vunpack.c.l.b16 %v102
  %v615 = vunpack.c.l.b16 %v103
  %v616 = vunpack.c.l.b16 %v104
  %v617 = vunpack.c.l.b16 %v105
  %v618 = vunpack.c.l.b16 %v106
  %v619 = vunpack.c.l.b16 %v107
  %v620 = vunpack.c.l.b16 %v108
  %v621 = vunpack.c.l.b16 %v109
  %v622 = vunpack.c.l.b16 %v110
  %v623 = vunpack.c.l.b16 %v111
  %v624 = vunpack.c.l.b16 %v112
  %v625 = vunpack.c.l.b16 %v113
  %v626 = vunpack.c.l.b16 %v114
  %v627 = vunpack.c.l.b16 %v115
  %v628 = vunpack.c.l.b16 %v116
  %v629 = vunpack.c.l.b16 %v117
  %v630 = vunpack.c.l.b16 %v118
  %v631 = vunpack.c.l.b16 %v119
  %v632 = vunpack.c.l.b16 %v120
  %v633 = vunpack.c.l.b16 %v121
  %v634 = vunpack.c.l.b16 %v122
  %v635 = vunpack.c.l.b16 %v123
  %v636 = vunpack.c.l.b16 %v124
  %v637 = vunpack.c.l.b16 %v125
  %v638 = vunpack.c.l.b16 %v126
  %v639 = vunpack.c.l.b16 %v127
  %v640 = vunpack.c.l.b16 %v128
  %v641 = vunpack.c.l.b16 %v129
  %v642 = vunpack.c.l.b16 %v130
  %v643 = vunpack.c.l.b16 %v131
  %v644 = vunpack.c.l.b16 %v132
  %v645 = vunpack.c.l.b16 %v133
  %v646 = vunpack.c.l.b16 %v134
  %v647 = vunpack.c.l.b16 %v135
  %v648 = vunpack.c.l.b16 %v136
  %v649 = vunpack.c.l.b16 %v137
  %v650 = vunpack.c.l.b16 %v138
  %v651 = vunpack.c.l.b16 %v139
  %v652 = vunpack.c.l.b16 %v140
  %v653 = vunpack.c.l.b16 %v141
  %v654 = vunpack.c.l.b16 %v142
  %v655 = vunpack.c.l.b16 %v143
  %v656 = vunpack.c.l.b16 %v144
  %v657 = vunpack.c.l.b16 %v145
  %v658 = vunpack.c.l.b16 %v146
  %v659 = vunpack.c.l.b16 %v147
  %v660 = vunpack.c.l.b16 %v148
  %v661 = vunpack.c.l.b16 %v149
  %v662 = vunpack.c.l.b16 %v150
  %v663 = vunpack.c.l.b16 %v151
  %v664 = vunpack.c.l.b16 %v152
  %v665 = vunpack.c.l.b16 %v153
  %v666 = vunpack.c.l.b16 %v154
  %v667 = vpack.c.b16 %v604, %v603
  %v668 = vpack.c.b16 %v606, %v605
  %v669 = vpack.c.b16 %v608, %v607
  %v670 = vpack.c.b16 %v610, %v609
  %v671 = vpack.c.b16 %v612, %v611
  %v672 = vpack.c.b16 %v614, %v613
  %v673 = vpack.c.b16 %v616, %v615
  %v674 = vpack.c.b16 %v618, %v617
  %v675 = vpack.c.b16 %v620, %v619
  %v676 = vpack.c.b16 %v622, %v621
  %v677 = vpack.c.b16 %v624, %v623
  %v678 = vpack.c.b16 %v626, %v625
  %v679 = vpack.c.b16 %v628, %v627
  %v680 = vpack.c.b16 %v630, %v629
  %v681 = vpack.c.b16 %v632, %v631
  %v682 = vpack.c.b16 %v634, %v633
  %v683 = vpack.c.b16 %v636, %v635
  %v684 = vpack.c.b16 %v638, %v637
  %v685 = vpack.c.b16 %v640, %v639
  %v686 = vpack.c.b16 %v642, %v641
  %v687 = vpack.c.b16 %v644, %v643
  %v688 = vpack.c.b16 %v646, %v645
  %v689 = vpack.c.b16 %v648, %v647
  %v690 = vpack.c.b16 %v650, %v649
  %v691 = vpack.c.b16 %v652, %v651
  %v692 = vpack.c.b16 %v654, %v653
  %v693 = vpack.c.b16 %v656, %v655
  %v694 = vpack.c.b16 %v658, %v657
  %v695 = vpack.c.b16 %v660, %v659
  %v696 = vpack.c.b16 %v662, %v661
  %v697 = vpack.c.b16 %v664, %v663
  %v698 = vpack.c.b16 %v666, %v665
  %v763 = vcombine.low %v27, %v28
  %v764 = vcombine.low %v29, %v30
  %v765 = vcombine.low %v31, %v32
  %v766 = vcombine.low %v33, %v34
  %v768 = vunpack.c.l.s4 1966171168
  %v769 = vunpack.c.0.s8 %v768
  %v770 = vlaneseq
  %v771 = vshrl.u32 %v770, 7
  %v772 = vsub.s32 %v769, %v771
  %v773 = vrot.slane %v763, %v772
  %v775 = vunpack.c.l.s4 1966171168
  %v776 = vunpack.c.0.s8 %v775
  %v777 = vlaneseq
  %v778 = vshrl.u32 %v777, 7
  %v779 = vsub.s32 %v776, %v778
  %v780 = vrot.slane %v764, %v779
  %v782 = vunpack.c.l.s4 1966171168
  %v783 = vunpack.c.0.s8 %v782
  %v784 = vlaneseq
  %v785 = vshrl.u32 %v784, 7
  %v786 = vsub.s32 %v783, %v785
  %v787 = vrot.slane %v765, %v786
  %v789 = vunpack.c.l.s4 1966171168
  %v790 = vunpack.c.0.s8 %v789
  %v791 = vlaneseq
  %v792 = vshrl.u32 %v791, 7
  %v793 = vsub.s32 %v790, %v792
  %v794 = vrot.slane %v766, %v793
  %v795 = vcombine.low %v773, %v780
  %v796 = vcombine.low %v787, %v794
  %v798 = vunpack.c.l.s4 1966171168
  %v799 = vunpack.c.0.s8 %v798
  %v800 = vlaneseq
  %v801 = vshrl.u32 %v800, 7
  %v802 = vsub.s32 %v799, %v801
  %v803 = vrot.slane %v795, %v802
  %v805 = vunpack.c.l.s4 1966171168
  %v806 = vunpack.c.0.s8 %v805
  %v807 = vlaneseq
  %v808 = vshrl.u32 %v807, 7
  %v809 = vsub.s32 %v806, %v808
  %v810 = vrot.slane %v796, %v809
  %v811 = vcombine.low %v803, %v810
  %v812 = vcombine.low %v35, %v36
  %v813 = vcombine.low %v37, %v38
  %v814 = vcombine.low %v39, %v40
  %v815 = vcombine.low %v41, %v42
  %v817 = vunpack.c.l.s4 1966171168
  %v818 = vunpack.c.0.s8 %v817
  %v819 = vlaneseq
  %v820 = vshrl.u32 %v819, 7
  %v821 = vsub.s32 %v818, %v820
  %v822 = vrot.slane %v812, %v821
  %v824 = vunpack.c.l.s4 1966171168
  %v825 = vunpack.c.0.s8 %v824
  %v826 = vlaneseq
  %v827 = vshrl.u32 %v826, 7
  %v828 = vsub.s32 %v825, %v827
  %v829 = vrot.slane %v813, %v828
  %v831 = vunpack.c.l.s4 1966171168
  %v832 = vunpack.c.0.s8 %v831
  %v833 = vlaneseq
  %v834 = vshrl.u32 %v833, 7
  %v835 = vsub.s32 %v832, %v834
  %v836 = vrot.slane %v814, %v835
  %v838 = vunpack.c.l.s4 1966171168
  %v839 = vunpack.c.0.s8 %v838
  %v840 = vlaneseq
  %v841 = vshrl.u32 %v840, 7
  %v842 = vsub.s32 %v839, %v841
  %v843 = vrot.slane %v815, %v842
  %v844 = vcombine.low %v822, %v829
  %v845 = vcombine.low %v836, %v843
  %v847 = vunpack.c.l.s4 1966171168
  %v848 = vunpack.c.0.s8 %v847
  %v849 = vlaneseq
  %v850 = vshrl.u32 %v849, 7
  %v851 = vsub.s32 %v848, %v850
  %v852 = vrot.slane %v844, %v851
  %v854 = vunpack.c.l.s4 1966171168
  %v855 = vunpack.c.0.s8 %v854
  %v856 = vlaneseq
  %v857 = vshrl.u32 %v856, 7
  %v858 = vsub.s32 %v855, %v857
  %v859 = vrot.slane %v845, %v858
  %v860 = vcombine.low %v852, %v859
  %v861 = vcombine.low %v43, %v44
  %v862 = vcombine.low %v45, %v46
  %v863 = vcombine.low %v47, %v48
  %v864 = vcombine.low %v49, %v50
  %v866 = vunpack.c.l.s4 1966171168
  %v867 = vunpack.c.0.s8 %v866
  %v868 = vlaneseq
  %v869 = vshrl.u32 %v868, 7
  %v870 = vsub.s32 %v867, %v869
  %v871 = vrot.slane %v861, %v870
  %v873 = vunpack.c.l.s4 1966171168
  %v874 = vunpack.c.0.s8 %v873
  %v875 = vlaneseq
  %v876 = vshrl.u32 %v875, 7
  %v877 = vsub.s32 %v874, %v876
  %v878 = vrot.slane %v862, %v877
  %v880 = vunpack.c.l.s4 1966171168
  %v881 = vunpack.c.0.s8 %v880
  %v882 = vlaneseq
  %v883 = vshrl.u32 %v882, 7
  %v884 = vsub.s32 %v881, %v883
  %v885 = vrot.slane %v863, %v884
  %v887 = vunpack.c.l.s4 1966171168
  %v888 = vunpack.c.0.s8 %v887
  %v889 = vlaneseq
  %v890 = vshrl.u32 %v889, 7
  %v891 = vsub.s32 %v888, %v890
  %v892 = vrot.slane %v864, %v891
  %v893 = vcombine.low %v871, %v878
  %v894 = vcombine.low %v885, %v892
  %v896 = vunpack.c.l.s4 1966171168
  %v897 = vunpack.c.0.s8 %v896
  %v898 = vlaneseq
  %v899 = vshrl.u32 %v898, 7
  %v900 = vsub.s32 %v897, %v899
  %v901 = vrot.slane %v893, %v900
  %v903 = vunpack.c.l.s4 1966171168
  %v904 = vunpack.c.0.s8 %v903
  %v905 = vlaneseq
  %v906 = vshrl.u32 %v905, 7
  %v907 = vsub.s32 %v904, %v906
  %v908 = vrot.slane %v894, %v907
  %v909 = vcombine.low %v901, %v908
  %v910 = vcombine.low %v51, %v52
  %v911 = vcombine.low %v53, %v54
  %v912 = vcombine.low %v55, %v56
  %v913 = vcombine.low %v57, %v58
  %v915 = vunpack.c.l.s4 1966171168
  %v916 = vunpack.c.0.s8 %v915
  %v917 = vlaneseq
  %v918 = vshrl.u32 %v917, 7
  %v919 = vsub.s32 %v916, %v918
  %v920 = vrot.slane %v910, %v919
  %v922 = vunpack.c.l.s4 1966171168
  %v923 = vunpack.c.0.s8 %v922
  %v924 = vlaneseq
  %v925 = vshrl.u32 %v924, 7
  %v926 = vsub.s32 %v923, %v925
  %v927 = vrot.slane %v911, %v926
  %v929 = vunpack.c.l.s4 1966171168
  %v930 = vunpack.c.0.s8 %v929
  %v931 = vlaneseq
  %v932 = vshrl.u32 %v931, 7
  %v933 = vsub.s32 %v930, %v932
  %v934 = vrot.slane %v912, %v933
  %v936 = vunpack.c.l.s4 1966171168
  %v937 = vunpack.c.0.s8 %v936
  %v938 = vlaneseq
  %v939 = vshrl.u32 %v938, 7
  %v940 = vsub.s32 %v937, %v939
  %v941 = vrot.slane %v913, %v940
  %v942 = vcombine.low %v920, %v927
  %v943 = vcombine.low %v934, %v941
  %v945 = vunpack.c.l.s4 1966171168
  %v946 = vunpack.c.0.s8 %v945
  %v947 = vlaneseq
  %v948 = vshrl.u32 %v947, 7
  %v949 = vsub.s32 %v946, %v948
  %v950 = vrot.slane %v942, %v949
  %v952 = vunpack.c.l.s4 1966171168
  %v953 = vunpack.c.0.s8 %v952
  %v954 = vlaneseq
  %v955 = vshrl.u32 %v954, 7
  %v956 = vsub.s32 %v953, %v955
  %v957 = vrot.slane %v943, %v956
  %v958 = vcombine.low %v950, %v957
  %v959 = vcombine.low %v59, %v60
  %v960 = vcombine.low %v61, %v62
  %v961 = vcombine.low %v63, %v64
  %v962 = vcombine.low %v65, %v66
  %v964 = vunpack.c.l.s4 1966171168
  %v965 = vunpack.c.0.s8 %v964
  %v966 = vlaneseq
  %v967 = vshrl.u32 %v966, 7
  %v968 = vsub.s32 %v965, %v967
  %v969 = vrot.slane %v959, %v968
  %v971 = vunpack.c.l.s4 1966171168
  %v972 = vunpack.c.0.s8 %v971
  %v973 = vlaneseq
  %v974 = vshrl.u32 %v973, 7
  %v975 = vsub.s32 %v972, %v974
  %v976 = vrot.slane %v960, %v975
  %v978 = vunpack.c.l.s4 1966171168
  %v979 = vunpack.c.0.s8 %v978
  %v980 = vlaneseq
  %v981 = vshrl.u32 %v980, 7
  %v982 = vsub.s32 %v979, %v981
  %v983 = vrot.slane %v961, %v982
  %v985 = vunpack.c.l.s4 1966171168
  %v986 = vunpack.c.0.s8 %v985
  %v987 = vlaneseq
  %v988 = vshrl.u32 %v987, 7
  %v989 = vsub.s32 %v986, %v988
  %v990 = vrot.slane %v962, %v989
  %v991 = vcombine.low %v969, %v976
  %v992 = vcombine.low %v983, %v990
  %v994 = vunpack.c.l.s4 1966171168
  %v995 = vunpack.c.0.s8 %v994
  %v996 = vlaneseq
  %v997 = vshrl.u32 %v996, 7
  %v998 = vsub.s32 %v995, %v997
  %v999 = vrot.slane %v991, %v998
  %v1001 = vunpack.c.l.s4 1966171168
  %v1002 = vunpack.c.0.s8 %v1001
  %v1003 = vlaneseq
  %v1004 = vshrl.u32 %v1003, 7
  %v1005 = vsub.s32 %v1002, %v1004
  %v1006 = vrot.slane %v992, %v1005
  %v1007 = vcombine.low %v999, %v1006
  %v1008 = vcombine.low %v67, %v68
  %v1009 = vcombine.low %v69, %v70
  %v1010 = vcombine.low %v71, %v72
  %v1011 = vcombine.low %v73, %v74
  %v1013 = vunpack.c.l.s4 1966171168
  %v1014 = vunpack.c.0.s8 %v1013
  %v1015 = vlaneseq
  %v1016 = vshrl.u32 %v1015, 7
  %v1017 = vsub.s32 %v1014, %v1016
  %v1018 = vrot.slane %v1008, %v1017
  %v1020 = vunpack.c.l.s4 1966171168
  %v1021 = vunpack.c.0.s8 %v1020
  %v1022 = vlaneseq
  %v1023 = vshrl.u32 %v1022, 7
  %v1024 = vsub.s32 %v1021, %v1023
  %v1025 = vrot.slane %v1009, %v1024
  %v1027 = vunpack.c.l.s4 1966171168
  %v1028 = vunpack.c.0.s8 %v1027
  %v1029 = vlaneseq
  %v1030 = vshrl.u32 %v1029, 7
  %v1031 = vsub.s32 %v1028, %v1030
  %v1032 = vrot.slane %v1010, %v1031
  %v1034 = vunpack.c.l.s4 1966171168
  %v1035 = vunpack.c.0.s8 %v1034
  %v1036 = vlaneseq
  %v1037 = vshrl.u32 %v1036, 7
  %v1038 = vsub.s32 %v1035, %v1037
  %v1039 = vrot.slane %v1011, %v1038
  %v1040 = vcombine.low %v1018, %v1025
  %v1041 = vcombine.low %v1032, %v1039
  %v1043 = vunpack.c.l.s4 1966171168
  %v1044 = vunpack.c.0.s8 %v1043
  %v1045 = vlaneseq
  %v1046 = vshrl.u32 %v1045, 7
  %v1047 = vsub.s32 %v1044, %v1046
  %v1048 = vrot.slane %v1040, %v1047
  %v1050 = vunpack.c.l.s4 1966171168
  %v1051 = vunpack.c.0.s8 %v1050
  %v1052 = vlaneseq
  %v1053 = vshrl.u32 %v1052, 7
  %v1054 = vsub.s32 %v1051, %v1053
  %v1055 = vrot.slane %v1041, %v1054
  %v1056 = vcombine.low %v1048, %v1055
  %v1057 = vcombine.low %v75, %v76
  %v1058 = vcombine.low %v77, %v78
  %v1059 = vcombine.low %v79, %v80
  %v1060 = vcombine.low %v81, %v82
  %v1062 = vunpack.c.l.s4 1966171168
  %v1063 = vunpack.c.0.s8 %v1062
  %v1064 = vlaneseq
  %v1065 = vshrl.u32 %v1064, 7
  %v1066 = vsub.s32 %v1063, %v1065
  %v1067 = vrot.slane %v1057, %v1066
  %v1069 = vunpack.c.l.s4 1966171168
  %v1070 = vunpack.c.0.s8 %v1069
  %v1071 = vlaneseq
  %v1072 = vshrl.u32 %v1071, 7
  %v1073 = vsub.s32 %v1070, %v1072
  %v1074 = vrot.slane %v1058, %v1073
  %v1076 = vunpack.c.l.s4 1966171168
  %v1077 = vunpack.c.0.s8 %v1076
  %v1078 = vlaneseq
  %v1079 = vshrl.u32 %v1078, 7
  %v1080 = vsub.s32 %v1077, %v1079
  %v1081 = vrot.slane %v1059, %v1080
  %v1083 = vunpack.c.l.s4 1966171168
  %v1084 = vunpack.c.0.s8 %v1083
  %v1085 = vlaneseq
  %v1086 = vshrl.u32 %v1085, 7
  %v1087 = vsub.s32 %v1084, %v1086
  %v1088 = vrot.slane %v1060, %v1087
  %v1089 = vcombine.low %v1067, %v1074
  %v1090 = vcombine.low %v1081, %v1088
  %v1092 = vunpack.c.l.s4 1966171168
  %v1093 = vunpack.c.0.s8 %v1092
  %v1094 = vlaneseq
  %v1095 = vshrl.u32 %v1094, 7
  %v1096 = vsub.s32 %v1093, %v1095
  %v1097 = vrot.slane %v1089, %v1096
  %v1099 = vunpack.c.l.s4 1966171168
  %v1100 = vunpack.c.0.s8 %v1099
  %v1101 = vlaneseq
  %v1102 = vshrl.u32 %v1101, 7
  %v1103 = vsub.s32 %v1100, %v1102
  %v1104 = vrot.slane %v1090, %v1103
  %v1105 = vcombine.low %v1097, %v1104
  %v1106 = vcombine.low %v83, %v84
  %v1107 = vcombine.low %v85, %v86
  %v1108 = vcombine.low %v87, %v88
  %v1109 = vcombine.low %v89, %v90
  %v1111 = vunpack.c.l.s4 1966171168
  %v1112 = vunpack.c.0.s8 %v1111
  %v1113 = vlaneseq
  %v1114 = vshrl.u32 %v1113, 7
  %v1115 = vsub.s32 %v1112, %v1114
  %v1116 = vrot.slane %v1106, %v1115
  %v1118 = vunpack.c.l.s4 1966171168
  %v1119 = vunpack.c.0.s8 %v1118
  %v1120 = vlaneseq
  %v1121 = vshrl.u32 %v1120, 7
  %v1122 = vsub.s32 %v1119, %v1121
  %v1123 = vrot.slane %v1107, %v1122
  %v1125 = vunpack.c.l.s4 1966171168
  %v1126 = vunpack.c.0.s8 %v1125
  %v1127 = vlaneseq
  %v1128 = vshrl.u32 %v1127, 7
  %v1129 = vsub.s32 %v1126, %v1128
  %v1130 = vrot.slane %v1108, %v1129
  %v1132 = vunpack.c.l.s4 1966171168
  %v1133 = vunpack.c.0.s8 %v1132
  %v1134 = vlaneseq
  %v1135 = vshrl.u32 %v1134, 7
  %v1136 = vsub.s32 %v1133, %v1135
  %v1137 = vrot.slane %v1109, %v1136
  %v1138 = vcombine.low %v1116, %v1123
  %v1139 = vcombine.low %v1130, %v1137
  %v1141 = vunpack.c.l.s4 1966171168
  %v1142 = vunpack.c.0.s8 %v1141
  %v1143 = vlaneseq
  %v1144 = vshrl.u32 %v1143, 7
  %v1145 = vsub.s32 %v1142, %v1144
  %v1146 = vrot.slane %v1138, %v1145
  %v1148 = vunpack.c.l.s4 1966171168
  %v1149 = vunpack.c.0.s8 %v1148
  %v1150 = vlaneseq
  %v1151 = vshrl.u32 %v1150, 7
  %v1152 = vsub.s32 %v1149, %v1151
  %v1153 = vrot.slane %v1139, %v1152
  %v1154 = vcombine.low %v1146, %v1153
  %vm1155 = vcmask 293888
  %v1157 = vsel %vm1155, %v667, 0
  %v1160 = vsel %vm1155, %v668, 0
  %v1163 = vsel %vm1155, %v669, 0
  %v1166 = vsel %vm1155, %v670, 0
  %v1169 = vsel %vm1155, %v671, 0
  %v1172 = vsel %vm1155, %v672, 0
  %v1175 = vsel %vm1155, %v673, 0
  %v1178 = vsel %vm1155, %v674, 0
  %v1181 = vsel %vm1155, %v675, 0
  %v1184 = vsel %vm1155, %v676, 0
  %v1187 = vsel %vm1155, %v677, 0
  %v1190 = vsel %vm1155, %v678, 0
  %v1193 = vsel %vm1155, %v679, 0
  %v1196 = vsel %vm1155, %v680, 0
  %v1199 = vsel %vm1155, %v681, 0
  %v1202 = vsel %vm1155, %v682, 0
  %v1205 = vsel %vm1155, %v683, 0
  %v1208 = vsel %vm1155, %v684, 0
  %v1211 = vsel %vm1155, %v685, 0
  %v1214 = vsel %vm1155, %v686, 0
  %v1217 = vsel %vm1155, %v687, 0
  %v1220 = vsel %vm1155, %v688, 0
  %v1223 = vsel %vm1155, %v689, 0
  %v1226 = vsel %vm1155, %v690, 0
  %v1229 = vsel %vm1155, %v691, 0
  %v1232 = vsel %vm1155, %v692, 0
  %v1235 = vsel %vm1155, %v693, 0
  %v1238 = vsel %vm1155, %v694, 0
  %v1241 = vsel %vm1155, %v695, 0
  %v1244 = vsel %vm1155, %v696, 0
  %v1247 = vsel %vm1155, %v697, 0
  %v1250 = vsel %vm1155, %v698, 0
  %v1253 = vsel %vm1155, %v811, 0
  %v1256 = vsel %vm1155, %v860, 0
  %v1259 = vsel %vm1155, %v909, 0
  %v1262 = vsel %vm1155, %v958, 0
  %v1265 = vsel %vm1155, %v1007, 0
  %v1268 = vsel %vm1155, %v1056, 0
  %v1271 = vsel %vm1155, %v1105, 0
  %v1274 = vsel %vm1155, %v1154, 0
  %1276 = vmatprep.subr.bf16.mxu0 0
  %1277 = vmatpush1.bf16.xpose.msra.mxu0 %v1274
  %1278 = vmatprep.subr.bf16.mxu0 0
  %1279 = vmatpush1.bf16.xpose.msra.mxu0 %v1271
  %1280 = vmatprep.subr.bf16.mxu0 0
  %1281 = vmatpush1.bf16.xpose.msra.mxu0 %v1268
  %1282 = vmatprep.subr.bf16.mxu0 0
  %1283 = vmatpush1.bf16.xpose.msra.mxu0 %v1265
  %1284 = vmatprep.subr.bf16.mxu0 0
  %1285 = vmatpush1.bf16.xpose.msra.mxu0 %v1262
  %1286 = vmatprep.subr.bf16.mxu0 0
  %1287 = vmatpush1.bf16.xpose.msra.mxu0 %v1259
  %1288 = vmatprep.subr.bf16.mxu0 0
  %1289 = vmatpush1.bf16.xpose.msra.mxu0 %v1256
  %1290 = vmatprep.subr.bf16.mxu0 0
  %1291 = vmatpush1.bf16.xpose.msra.mxu0 %v1253
  %1292 = vmatprep.subr.bf16.mxu0 0
  %1293 = vmatpush2.bf16.xpose.msra.mxu0 0
  %1294 = vmatprep.subr.bf16.mxu0 0
  %1295 = vmatpush2.bf16.xpose.msra.mxu0 0
  %1296 = vmatprep.subr.bf16.mxu0 0
  %1297 = vmatpush2.bf16.xpose.msra.mxu0 0
  %1298 = vmatprep.subr.bf16.mxu0 0
  %1299 = vmatpush2.bf16.xpose.msra.mxu0 0
  %1300 = vmatprep.subr.bf16.mxu0 0
  %1301 = vmatpush2.bf16.xpose.msra.mxu0 0
  %1302 = vmatprep.subr.bf16.mxu0 0
  %1303 = vmatpush2.bf16.xpose.msra.mxu0 0
  %1304 = vmatprep.subr.bf16.mxu0 0
  %1305 = vmatpush2.bf16.xpose.msra.mxu0 0
  %1306 = vmatprep.subr.bf16.mxu0 0
  %1307 = vmatpush2.bf16.xpose.msra.mxu0 0
  %1308 = vmatprep.mubr.bf16.mxu0 0
  %1309 = vmatmul.mubr.bf16.gmra.mxu0 %v1157
  %v1310 = vpop.f32.mrf.mxu0
  %v1311 = vadd.f32 %v222, %v1310
  %v1312 = vpop.f32.mrf.mxu0
  %v1313 = vpop.f32.mrf.mxu0
  %v1314 = vadd.f32 %v227, %v1313
  %v1315 = vpop.f32.mrf.mxu0
  %1316 = vmatprep.mubr.bf16.mxu0 0
  %1317 = vmatmul.mubr.bf16.gmra.mxu0 %v1160
  %v1318 = vpop.f32.mrf.mxu0
  %v1319 = vadd.f32 %v232, %v1318
  %v1320 = vpop.f32.mrf.mxu0
  %v1321 = vpop.f32.mrf.mxu0
  %v1322 = vadd.f32 %v237, %v1321
  %v1323 = vpop.f32.mrf.mxu0
  %1324 = vmatprep.mubr.bf16.mxu0 0
  %1325 = vmatmul.mubr.bf16.gmra.mxu0 %v1163
  %v1326 = vpop.f32.mrf.mxu0
  %v1327 = vadd.f32 %v242, %v1326
  %v1328 = vpop.f32.mrf.mxu0
  %v1329 = vpop.f32.mrf.mxu0
  %v1330 = vadd.f32 %v247, %v1329
  %v1331 = vpop.f32.mrf.mxu0
  %1332 = vmatprep.mubr.bf16.mxu0 0
  %1333 = vmatmul.mubr.bf16.gmra.mxu0 %v1166
  %v1334 = vpop.f32.mrf.mxu0
  %v1335 = vadd.f32 %v252, %v1334
  %v1336 = vpop.f32.mrf.mxu0
  %v1337 = vpop.f32.mrf.mxu0
  %v1338 = vadd.f32 %v257, %v1337
  %v1339 = vpop.f32.mrf.mxu0
  %1340 = vmatprep.mubr.bf16.mxu0 0
  %1341 = vmatmul.mubr.bf16.gmra.mxu0 %v1169
  %v1342 = vpop.f32.mrf.mxu0
  %v1343 = vadd.f32 %v262, %v1342
  %v1344 = vpop.f32.mrf.mxu0
  %v1345 = vpop.f32.mrf.mxu0
  %v1346 = vadd.f32 %v267, %v1345
  %v1347 = vpop.f32.mrf.mxu0
  %1348 = vmatprep.mubr.bf16.mxu0 0
  %1349 = vmatmul.mubr.bf16.gmra.mxu0 %v1172
  %v1350 = vpop.f32.mrf.mxu0
  %v1351 = vadd.f32 %v272, %v1350
  %v1352 = vpop.f32.mrf.mxu0
  %v1353 = vpop.f32.mrf.mxu0
  %v1354 = vadd.f32 %v277, %v1353
  %v1355 = vpop.f32.mrf.mxu0
  %1356 = vmatprep.mubr.bf16.mxu0 0
  %1357 = vmatmul.mubr.bf16.gmra.mxu0 %v1175
  %v1358 = vpop.f32.mrf.mxu0
  %v1359 = vadd.f32 %v282, %v1358
  %v1360 = vpop.f32.mrf.mxu0
  %v1361 = vpop.f32.mrf.mxu0
  %v1362 = vadd.f32 %v287, %v1361
  %v1363 = vpop.f32.mrf.mxu0
  %1364 = vmatprep.mubr.bf16.mxu0 0
  %1365 = vmatmul.mubr.bf16.gmra.mxu0 %v1178
  %v1366 = vpop.f32.mrf.mxu0
  %v1367 = vadd.f32 %v292, %v1366
  %v1368 = vpop.f32.mrf.mxu0
  %v1369 = vpop.f32.mrf.mxu0
  %v1370 = vadd.f32 %v297, %v1369
  %v1371 = vpop.f32.mrf.mxu0
  %1372 = vmatprep.mubr.bf16.mxu0 0
  %1373 = vmatmul.mubr.bf16.gmra.mxu0 %v1181
  %v1374 = vpop.f32.mrf.mxu0
  %v1375 = vadd.f32 %v302, %v1374
  %v1376 = vpop.f32.mrf.mxu0
  %v1377 = vpop.f32.mrf.mxu0
  %v1378 = vadd.f32 %v307, %v1377
  %v1379 = vpop.f32.mrf.mxu0
  %1380 = vmatprep.mubr.bf16.mxu0 0
  %1381 = vmatmul.mubr.bf16.gmra.mxu0 %v1184
  %v1382 = vpop.f32.mrf.mxu0
  %v1383 = vadd.f32 %v312, %v1382
  %v1384 = vpop.f32.mrf.mxu0
  %v1385 = vpop.f32.mrf.mxu0
  %v1386 = vadd.f32 %v317, %v1385
  %v1387 = vpop.f32.mrf.mxu0
  %1388 = vmatprep.mubr.bf16.mxu0 0
  %1389 = vmatmul.mubr.bf16.gmra.mxu0 %v1187
  %v1390 = vpop.f32.mrf.mxu0
  %v1391 = vadd.f32 %v322, %v1390
  %v1392 = vpop.f32.mrf.mxu0
  %v1393 = vpop.f32.mrf.mxu0
  %v1394 = vadd.f32 %v327, %v1393
  %v1395 = vpop.f32.mrf.mxu0
  %1396 = vmatprep.mubr.bf16.mxu0 0
  %1397 = vmatmul.mubr.bf16.gmra.mxu0 %v1190
  %v1398 = vpop.f32.mrf.mxu0
  %v1399 = vadd.f32 %v332, %v1398
  %v1400 = vpop.f32.mrf.mxu0
  %v1401 = vpop.f32.mrf.mxu0
  %v1402 = vadd.f32 %v337, %v1401
  %v1403 = vpop.f32.mrf.mxu0
  %1404 = vmatprep.mubr.bf16.mxu0 0
  %1405 = vmatmul.mubr.bf16.gmra.mxu0 %v1193
  %v1406 = vpop.f32.mrf.mxu0
  %v1407 = vadd.f32 %v342, %v1406
  %v1408 = vpop.f32.mrf.mxu0
  %v1409 = vpop.f32.mrf.mxu0
  %v1410 = vadd.f32 %v347, %v1409
  %v1411 = vpop.f32.mrf.mxu0
  %1412 = vmatprep.mubr.bf16.mxu0 0
  %1413 = vmatmul.mubr.bf16.gmra.mxu0 %v1196
  %v1414 = vpop.f32.mrf.mxu0
  %v1415 = vadd.f32 %v352, %v1414
  %v1416 = vpop.f32.mrf.mxu0
  %v1417 = vpop.f32.mrf.mxu0
  %v1418 = vadd.f32 %v357, %v1417
  %v1419 = vpop.f32.mrf.mxu0
  %1420 = vmatprep.mubr.bf16.mxu0 0
  %1421 = vmatmul.mubr.bf16.gmra.mxu0 %v1199
  %v1422 = vpop.f32.mrf.mxu0
  %v1423 = vadd.f32 %v362, %v1422
  %v1424 = vpop.f32.mrf.mxu0
  %v1425 = vpop.f32.mrf.mxu0
  %v1426 = vadd.f32 %v367, %v1425
  %v1427 = vpop.f32.mrf.mxu0
  %1428 = vmatprep.mubr.bf16.mxu0 0
  %1429 = vmatmul.mubr.bf16.gmra.mxu0 %v1202
  %v1430 = vpop.f32.mrf.mxu0
  %v1431 = vadd.f32 %v372, %v1430
  %v1432 = vpop.f32.mrf.mxu0
  %v1433 = vpop.f32.mrf.mxu0
  %v1434 = vadd.f32 %v377, %v1433
  %v1435 = vpop.f32.mrf.mxu0
  %1436 = vmatprep.mubr.bf16.mxu0 0
  %1437 = vmatmul.mubr.bf16.gmra.mxu0 %v1205
  %v1438 = vpop.f32.mrf.mxu0
  %v1439 = vadd.f32 %v382, %v1438
  %v1440 = vpop.f32.mrf.mxu0
  %v1441 = vpop.f32.mrf.mxu0
  %v1442 = vadd.f32 %v387, %v1441
  %v1443 = vpop.f32.mrf.mxu0
  %1444 = vmatprep.mubr.bf16.mxu0 0
  %1445 = vmatmul.mubr.bf16.gmra.mxu0 %v1208
  %v1446 = vpop.f32.mrf.mxu0
  %v1447 = vadd.f32 %v392, %v1446
  %v1448 = vpop.f32.mrf.mxu0
  %v1449 = vpop.f32.mrf.mxu0
  %v1450 = vadd.f32 %v397, %v1449
  %v1451 = vpop.f32.mrf.mxu0
  %1452 = vmatprep.mubr.bf16.mxu0 0
  %1453 = vmatmul.mubr.bf16.gmra.mxu0 %v1211
  %v1454 = vpop.f32.mrf.mxu0
  %v1455 = vadd.f32 %v402, %v1454
  %v1456 = vpop.f32.mrf.mxu0
  %v1457 = vpop.f32.mrf.mxu0
  %v1458 = vadd.f32 %v407, %v1457
  %v1459 = vpop.f32.mrf.mxu0
  %1460 = vmatprep.mubr.bf16.mxu0 0
  %1461 = vmatmul.mubr.bf16.gmra.mxu0 %v1214
  %v1462 = vpop.f32.mrf.mxu0
  %v1463 = vadd.f32 %v412, %v1462
  %v1464 = vpop.f32.mrf.mxu0
  %v1465 = vpop.f32.mrf.mxu0
  %v1466 = vadd.f32 %v417, %v1465
  %v1467 = vpop.f32.mrf.mxu0
  %1468 = vmatprep.mubr.bf16.mxu0 0
  %1469 = vmatmul.mubr.bf16.gmra.mxu0 %v1217
  %v1470 = vpop.f32.mrf.mxu0
  %v1471 = vadd.f32 %v422, %v1470
  %v1472 = vpop.f32.mrf.mxu0
  %v1473 = vpop.f32.mrf.mxu0
  %v1474 = vadd.f32 %v427, %v1473
  %v1475 = vpop.f32.mrf.mxu0
  %1476 = vmatprep.mubr.bf16.mxu0 0
  %1477 = vmatmul.mubr.bf16.gmra.mxu0 %v1220
  %v1478 = vpop.f32.mrf.mxu0
  %v1479 = vadd.f32 %v432, %v1478
  %v1480 = vpop.f32.mrf.mxu0
  %v1481 = vpop.f32.mrf.mxu0
  %v1482 = vadd.f32 %v437, %v1481
  %v1483 = vpop.f32.mrf.mxu0
  %1484 = vmatprep.mubr.bf16.mxu0 0
  %1485 = vmatmul.mubr.bf16.gmra.mxu0 %v1223
  %v1486 = vpop.f32.mrf.mxu0
  %v1487 = vadd.f32 %v442, %v1486
  %v1488 = vpop.f32.mrf.mxu0
  %v1489 = vpop.f32.mrf.mxu0
  %v1490 = vadd.f32 %v447, %v1489
  %v1491 = vpop.f32.mrf.mxu0
  %1492 = vmatprep.mubr.bf16.mxu0 0
  %1493 = vmatmul.mubr.bf16.gmra.mxu0 %v1226
  %v1494 = vpop.f32.mrf.mxu0
  %v1495 = vadd.f32 %v452, %v1494
  %v1496 = vpop.f32.mrf.mxu0
  %v1497 = vpop.f32.mrf.mxu0
  %v1498 = vadd.f32 %v457, %v1497
  %v1499 = vpop.f32.mrf.mxu0
  %1500 = vmatprep.mubr.bf16.mxu0 0
  %1501 = vmatmul.mubr.bf16.gmra.mxu0 %v1229
  %v1502 = vpop.f32.mrf.mxu0
  %v1503 = vadd.f32 %v462, %v1502
  %v1504 = vpop.f32.mrf.mxu0
  %v1505 = vpop.f32.mrf.mxu0
  %v1506 = vadd.f32 %v467, %v1505
  %v1507 = vpop.f32.mrf.mxu0
  %1508 = vmatprep.mubr.bf16.mxu0 0
  %1509 = vmatmul.mubr.bf16.gmra.mxu0 %v1232
  %v1510 = vpop.f32.mrf.mxu0
  %v1511 = vadd.f32 %v472, %v1510
  %v1512 = vpop.f32.mrf.mxu0
  %v1513 = vpop.f32.mrf.mxu0
  %v1514 = vadd.f32 %v477, %v1513
  %v1515 = vpop.f32.mrf.mxu0
  %1516 = vmatprep.mubr.bf16.mxu0 0
  %1517 = vmatmul.mubr.bf16.gmra.mxu0 %v1235
  %v1518 = vpop.f32.mrf.mxu0
  %v1519 = vadd.f32 %v482, %v1518
  %v1520 = vpop.f32.mrf.mxu0
  %v1521 = vpop.f32.mrf.mxu0
  %v1522 = vadd.f32 %v487, %v1521
  %v1523 = vpop.f32.mrf.mxu0
  %1524 = vmatprep.mubr.bf16.mxu0 0
  %1525 = vmatmul.mubr.bf16.gmra.mxu0 %v1238
  %v1526 = vpop.f32.mrf.mxu0
  %v1527 = vadd.f32 %v492, %v1526
  %v1528 = vpop.f32.mrf.mxu0
  %v1529 = vpop.f32.mrf.mxu0
  %v1530 = vadd.f32 %v497, %v1529
  %v1531 = vpop.f32.mrf.mxu0
  %1532 = vmatprep.mubr.bf16.mxu0 0
  %1533 = vmatmul.mubr.bf16.gmra.mxu0 %v1241
  %v1534 = vpop.f32.mrf.mxu0
  %v1535 = vadd.f32 %v502, %v1534
  %v1536 = vpop.f32.mrf.mxu0
  %v1537 = vpop.f32.mrf.mxu0
  %v1538 = vadd.f32 %v507, %v1537
  %v1539 = vpop.f32.mrf.mxu0
  %1540 = vmatprep.mubr.bf16.mxu0 0
  %1541 = vmatmul.mubr.bf16.gmra.mxu0 %v1244
  %v1542 = vpop.f32.mrf.mxu0
  %v1543 = vadd.f32 %v512, %v1542
  %v1544 = vpop.f32.mrf.mxu0
  %v1545 = vpop.f32.mrf.mxu0
  %v1546 = vadd.f32 %v517, %v1545
  %v1547 = vpop.f32.mrf.mxu0
  %1548 = vmatprep.mubr.bf16.mxu0 0
  %1549 = vmatmul.mubr.bf16.gmra.mxu0 %v1247
  %v1550 = vpop.f32.mrf.mxu0
  %v1551 = vadd.f32 %v522, %v1550
  %v1552 = vpop.f32.mrf.mxu0
  %v1553 = vpop.f32.mrf.mxu0
  %v1554 = vadd.f32 %v527, %v1553
  %v1555 = vpop.f32.mrf.mxu0
  %1556 = vmatprep.mubr.bf16.mxu0 0
  %1557 = vmatmul.mubr.bf16.gmra.mxu0 %v1250
  %v1558 = vpop.f32.mrf.mxu0
  %v1559 = vadd.f32 %v532, %v1558
  %v1560 = vpop.f32.mrf.mxu0
  %v1561 = vpop.f32.mrf.mxu0
  %v1562 = vadd.f32 %v537, %v1561
  %v1563 = vpop.f32.mrf.mxu0
  %1564 = vdwg.mxu0
  %v1565 = vmax.f32 %v1311, 0.0
  %v1566 = vmax.f32 %v1314, 0.0
  %v1567 = vmax.f32 %v1319, 0.0
  %v1568 = vmax.f32 %v1322, 0.0
  %v1569 = vmax.f32 %v1327, 0.0
  %v1570 = vmax.f32 %v1330, 0.0
  %v1571 = vmax.f32 %v1335, 0.0
  %v1572 = vmax.f32 %v1338, 0.0
  %v1573 = vmax.f32 %v1343, 0.0
  %v1574 = vmax.f32 %v1346, 0.0
  %v1575 = vmax.f32 %v1351, 0.0
  %v1576 = vmax.f32 %v1354, 0.0
  %v1577 = vmax.f32 %v1359, 0.0
  %v1578 = vmax.f32 %v1362, 0.0
  %v1579 = vmax.f32 %v1367, 0.0
  %v1580 = vmax.f32 %v1370, 0.0
  %v1581 = vmax.f32 %v1375, 0.0
  %v1582 = vmax.f32 %v1378, 0.0
  %v1583 = vmax.f32 %v1383, 0.0
  %v1584 = vmax.f32 %v1386, 0.0
  %v1585 = vmax.f32 %v1391, 0.0
  %v1586 = vmax.f32 %v1394, 0.0
  %v1587 = vmax.f32 %v1399, 0.0
  %v1588 = vmax.f32 %v1402, 0.0
  %v1589 = vmax.f32 %v1407, 0.0
  %v1590 = vmax.f32 %v1410, 0.0
  %v1591 = vmax.f32 %v1415, 0.0
  %v1592 = vmax.f32 %v1418, 0.0
  %v1593 = vmax.f32 %v1423, 0.0
  %v1594 = vmax.f32 %v1426, 0.0
  %v1595 = vmax.f32 %v1431, 0.0
  %v1596 = vmax.f32 %v1434, 0.0
  %v1597 = vmax.f32 %v1439, 0.0
  %v1598 = vmax.f32 %v1442, 0.0
  %v1599 = vmax.f32 %v1447, 0.0
  %v1600 = vmax.f32 %v1450, 0.0
  %v1601 = vmax.f32 %v1455, 0.0
  %v1602 = vmax.f32 %v1458, 0.0
  %v1603 = vmax.f32 %v1463, 0.0
  %v1604 = vmax.f32 %v1466, 0.0
  %v1605 = vmax.f32 %v1471, 0.0
  %v1606 = vmax.f32 %v1474, 0.0
  %v1607 = vmax.f32 %v1479, 0.0
  %v1608 = vmax.f32 %v1482, 0.0
  %v1609 = vmax.f32 %v1487, 0.0
  %v1610 = vmax.f32 %v1490, 0.0
  %v1611 = vmax.f32 %v1495, 0.0
  %v1612 = vmax.f32 %v1498, 0.0
  %v1613 = vmax.f32 %v1503, 0.0
  %v1614 = vmax.f32 %v1506, 0.0
  %v1615 = vmax.f32 %v1511, 0.0
  %v1616 = vmax.f32 %v1514, 0.0
  %v1617 = vmax.f32 %v1519, 0.0
  %v1618 = vmax.f32 %v1522, 0.0
  %v1619 = vmax.f32 %v1527, 0.0
  %v1620 = vmax.f32 %v1530, 0.0
  %v1621 = vmax.f32 %v1535, 0.0
  %v1622 = vmax.f32 %v1538, 0.0
  %v1623 = vmax.f32 %v1543, 0.0
  %v1624 = vmax.f32 %v1546, 0.0
  %v1625 = vmax.f32 %v1551, 0.0
  %v1626 = vmax.f32 %v1554, 0.0
  %v1627 = vmax.f32 %v1559, 0.0
  %v1628 = vmax.f32 %v1562, 0.0
  %v1629 = vpack.c.bf16 %v1566, %v1565
  %v1630 = vpack.c.bf16 %v1568, %v1567
  %v1631 = vpack.c.bf16 %v1570, %v1569
  %v1632 = vpack.c.bf16 %v1572, %v1571
  %v1633 = vpack.c.bf16 %v1574, %v1573
  %v1634 = vpack.c.bf16 %v1576, %v1575
  %v1635 = vpack.c.bf16 %v1578, %v1577
  %v1636 = vpack.c.bf16 %v1580, %v1579
  %v1637 = vpack.c.bf16 %v1582, %v1581
  %v1638 = vpack.c.bf16 %v1584, %v1583
  %v1639 = vpack.c.bf16 %v1586, %v1585
  %v1640 = vpack.c.bf16 %v1588, %v1587
  %v1641 = vpack.c.bf16 %v1590, %v1589
  %v1642 = vpack.c.bf16 %v1592, %v1591
  %v1643 = vpack.c.bf16 %v1594, %v1593
  %v1644 = vpack.c.bf16 %v1596, %v1595
  %v1645 = vpack.c.bf16 %v1598, %v1597
  %v1646 = vpack.c.bf16 %v1600, %v1599
  %v1647 = vpack.c.bf16 %v1602, %v1601
  %v1648 = vpack.c.bf16 %v1604, %v1603
  %v1649 = vpack.c.bf16 %v1606, %v1605
  %v1650 = vpack.c.bf16 %v1608, %v1607
  %v1651 = vpack.c.bf16 %v1610, %v1609
  %v1652 = vpack.c.bf16 %v1612, %v1611
  %v1653 = vpack.c.bf16 %v1614, %v1613
  %v1654 = vpack.c.bf16 %v1616, %v1615
  %v1655 = vpack.c.bf16 %v1618, %v1617
  %v1656 = vpack.c.bf16 %v1620, %v1619
  %v1657 = vpack.c.bf16 %v1622, %v1621
  %v1658 = vpack.c.bf16 %v1624, %v1623
  %v1659 = vpack.c.bf16 %v1626, %v1625
  %v1660 = vpack.c.bf16 %v1628, %v1627
  %v1661 = vld [vmem:[%s3] sm:$0xff]
  %v1662 = vld [vmem:[%s3 + $0x8] sm:$0xff]
  %v1663 = vld [vmem:[%s3 + $0x10] sm:$0xff]
  %v1664 = vld [vmem:[%s3 + $0x18] sm:$0xff]
  %v1665 = vld [vmem:[%s3 + $0x20] sm:$0xff]
  %v1666 = vld [vmem:[%s3 + $0x28] sm:$0xff]
  %v1667 = vld [vmem:[%s3 + $0x30] sm:$0xff]
  %v1668 = vld [vmem:[%s3 + $0x38] sm:$0xff]
  %v1669 = vld [vmem:[%s3 + $0x40] sm:$0xff]
  %v1670 = vld [vmem:[%s3 + $0x48] sm:$0xff]
  %v1671 = vld [vmem:[%s3 + $0x50] sm:$0xff]
  %v1672 = vld [vmem:[%s3 + $0x58] sm:$0xff]
  %v1673 = vld [vmem:[%s3 + $0x60] sm:$0xff]
  %v1674 = vld [vmem:[%s3 + $0x68] sm:$0xff]
  %v1675 = vld [vmem:[%s3 + $0x70] sm:$0xff]
  %v1676 = vld [vmem:[%s3 + $0x78] sm:$0xff]
  %v1677 = vld [vmem:[%s3 + $0x80] sm:$0xff]
  %v1678 = vld [vmem:[%s3 + $0x88] sm:$0xff]
  %v1679 = vld [vmem:[%s3 + $0x90] sm:$0xff]
  %v1680 = vld [vmem:[%s3 + $0x98] sm:$0xff]
  %v1681 = vld [vmem:[%s3 + $0xa0] sm:$0xff]
  %v1682 = vld [vmem:[%s3 + $0xa8] sm:$0xff]
  %v1683 = vld [vmem:[%s3 + $0xb0] sm:$0xff]
  %v1684 = vld [vmem:[%s3 + $0xb8] sm:$0xff]
  %v1685 = vld [vmem:[%s3 + $0xc0] sm:$0xff]
  %v1686 = vld [vmem:[%s3 + $0xc8] sm:$0xff]
  %v1687 = vld [vmem:[%s3 + $0xd0] sm:$0xff]
  %v1688 = vld [vmem:[%s3 + $0xd8] sm:$0xff]
  %v1689 = vld [vmem:[%s3 + $0xe0] sm:$0xff]
  %v1690 = vld [vmem:[%s3 + $0xe8] sm:$0xff]
  %v1691 = vld [vmem:[%s3 + $0xf0] sm:$0xff]
  %v1692 = vld [vmem:[%s3 + $0xf8] sm:$0xff]
  %v1693 = vld [vmem:[%s3 + $0x100] sm:$0xff]
  %v1694 = vld [vmem:[%s3 + $0x108] sm:$0xff]
  %v1695 = vld [vmem:[%s3 + $0x110] sm:$0xff]
  %v1696 = vld [vmem:[%s3 + $0x118] sm:$0xff]
  %v1697 = vld [vmem:[%s3 + $0x120] sm:$0xff]
  %v1698 = vld [vmem:[%s3 + $0x128] sm:$0xff]
  %v1699 = vld [vmem:[%s3 + $0x130] sm:$0xff]
  %v1700 = vld [vmem:[%s3 + $0x138] sm:$0xff]
  %v1701 = vld [vmem:[%s3 + $0x140] sm:$0xff]
  %v1702 = vld [vmem:[%s3 + $0x148] sm:$0xff]
  %v1703 = vld [vmem:[%s3 + $0x150] sm:$0xff]
  %v1704 = vld [vmem:[%s3 + $0x158] sm:$0xff]
  %v1705 = vld [vmem:[%s3 + $0x160] sm:$0xff]
  %v1706 = vld [vmem:[%s3 + $0x168] sm:$0xff]
  %v1707 = vld [vmem:[%s3 + $0x170] sm:$0xff]
  %v1708 = vld [vmem:[%s3 + $0x178] sm:$0xff]
  %v1709 = vld [vmem:[%s3 + $0x180] sm:$0xff]
  %v1710 = vld [vmem:[%s3 + $0x188] sm:$0xff]
  %v1711 = vld [vmem:[%s3 + $0x190] sm:$0xff]
  %v1712 = vld [vmem:[%s3 + $0x198] sm:$0xff]
  %v1713 = vld [vmem:[%s3 + $0x1a0] sm:$0xff]
  %v1714 = vld [vmem:[%s3 + $0x1a8] sm:$0xff]
  %v1715 = vld [vmem:[%s3 + $0x1b0] sm:$0xff]
  %v1716 = vld [vmem:[%s3 + $0x1b8] sm:$0xff]
  %v1717 = vld [vmem:[%s3 + $0x1c0] sm:$0xff]
  %v1718 = vld [vmem:[%s3 + $0x1c8] sm:$0xff]
  %v1719 = vld [vmem:[%s3 + $0x1d0] sm:$0xff]
  %v1720 = vld [vmem:[%s3 + $0x1d8] sm:$0xff]
  %v1721 = vld [vmem:[%s3 + $0x1e0] sm:$0xff]
  %v1722 = vld [vmem:[%s3 + $0x1e8] sm:$0xff]
  %v1723 = vld [vmem:[%s3 + $0x1f0] sm:$0xff]
  %v1724 = vld [vmem:[%s3 + $0x1f8] sm:$0xff]
  %v1725 = vld [vmem:[%s4] sm:$0xff]
  %v1726 = vld [vmem:[%s4 + $0x8] sm:$0xff]
  %v1727 = vld [vmem:[%s4 + $0x10] sm:$0xff]
  %v1728 = vld [vmem:[%s4 + $0x18] sm:$0xff]
  %v1729 = vld [vmem:[%s4 + $0x20] sm:$0xff]
  %v1730 = vld [vmem:[%s4 + $0x28] sm:$0xff]
  %v1731 = vld [vmem:[%s4 + $0x30] sm:$0xff]
  %v1732 = vld [vmem:[%s4 + $0x38] sm:$0xff]
  %v1733 = vld [vmem:[%s4 + $0x40] sm:$0xff]
  %v1734 = vld [vmem:[%s4 + $0x48] sm:$0xff]
  %v1735 = vld [vmem:[%s4 + $0x50] sm:$0xff]
  %v1736 = vld [vmem:[%s4 + $0x58] sm:$0xff]
  %v1737 = vld [vmem:[%s4 + $0x60] sm:$0xff]
  %v1738 = vld [vmem:[%s4 + $0x68] sm:$0xff]
  %v1739 = vld [vmem:[%s4 + $0x70] sm:$0xff]
  %v1740 = vld [vmem:[%s4 + $0x78] sm:$0xff]
  %v1741 = vld [vmem:[%s4 + $0x80] sm:$0xff]
  %v1742 = vld [vmem:[%s4 + $0x88] sm:$0xff]
  %v1743 = vld [vmem:[%s4 + $0x90] sm:$0xff]
  %v1744 = vld [vmem:[%s4 + $0x98] sm:$0xff]
  %v1745 = vld [vmem:[%s4 + $0xa0] sm:$0xff]
  %v1746 = vld [vmem:[%s4 + $0xa8] sm:$0xff]
  %v1747 = vld [vmem:[%s4 + $0xb0] sm:$0xff]
  %v1748 = vld [vmem:[%s4 + $0xb8] sm:$0xff]
  %v1749 = vld [vmem:[%s4 + $0xc0] sm:$0xff]
  %v1750 = vld [vmem:[%s4 + $0xc8] sm:$0xff]
  %v1751 = vld [vmem:[%s4 + $0xd0] sm:$0xff]
  %v1752 = vld [vmem:[%s4 + $0xd8] sm:$0xff]
  %v1753 = vld [vmem:[%s4 + $0xe0] sm:$0xff]
  %v1754 = vld [vmem:[%s4 + $0xe8] sm:$0xff]
  %v1755 = vld [vmem:[%s4 + $0xf0] sm:$0xff]
  %v1756 = vld [vmem:[%s4 + $0xf8] sm:$0xff]
  %1758 = vset.pattern.permute.xlu0 0
  %1759 = vperm.xlu0 %1758, %v1725
  %v1760 = vpop.permute.xlu0 %1759
  %1763 = vset.pattern.permute.xlu0 0
  %1764 = vperm.xlu0 %1763, %v1726
  %v1765 = vpop.permute.xlu0 %1764
  %1768 = vset.pattern.permute.xlu0 0
  %1769 = vperm.xlu0 %1768, %v1727
  %v1770 = vpop.permute.xlu0 %1769
  %1773 = vset.pattern.permute.xlu0 0
  %1774 = vperm.xlu0 %1773, %v1728
  %v1775 = vpop.permute.xlu0 %1774
  %1778 = vset.pattern.permute.xlu0 0
  %1779 = vperm.xlu0 %1778, %v1729
  %v1780 = vpop.permute.xlu0 %1779
  %1783 = vset.pattern.permute.xlu0 0
  %1784 = vperm.xlu0 %1783, %v1730
  %v1785 = vpop.permute.xlu0 %1784
  %1788 = vset.pattern.permute.xlu0 0
  %1789 = vperm.xlu0 %1788, %v1731
  %v1790 = vpop.permute.xlu0 %1789
  %1793 = vset.pattern.permute.xlu0 0
  %1794 = vperm.xlu0 %1793, %v1732
  %v1795 = vpop.permute.xlu0 %1794
  %1798 = vset.pattern.permute.xlu0 0
  %1799 = vperm.xlu0 %1798, %v1733
  %v1800 = vpop.permute.xlu0 %1799
  %1803 = vset.pattern.permute.xlu0 0
  %1804 = vperm.xlu0 %1803, %v1734
  %v1805 = vpop.permute.xlu0 %1804
  %1808 = vset.pattern.permute.xlu0 0
  %1809 = vperm.xlu0 %1808, %v1735
  %v1810 = vpop.permute.xlu0 %1809
  %1813 = vset.pattern.permute.xlu0 0
  %1814 = vperm.xlu0 %1813, %v1736
  %v1815 = vpop.permute.xlu0 %1814
  %1818 = vset.pattern.permute.xlu0 0
  %1819 = vperm.xlu0 %1818, %v1737
  %v1820 = vpop.permute.xlu0 %1819
  %1823 = vset.pattern.permute.xlu0 0
  %1824 = vperm.xlu0 %1823, %v1738
  %v1825 = vpop.permute.xlu0 %1824
  %1828 = vset.pattern.permute.xlu0 0
  %1829 = vperm.xlu0 %1828, %v1739
  %v1830 = vpop.permute.xlu0 %1829
  %1833 = vset.pattern.permute.xlu0 0
  %1834 = vperm.xlu0 %1833, %v1740
  %v1835 = vpop.permute.xlu0 %1834
  %1838 = vset.pattern.permute.xlu0 0
  %1839 = vperm.xlu0 %1838, %v1741
  %v1840 = vpop.permute.xlu0 %1839
  %1843 = vset.pattern.permute.xlu0 0
  %1844 = vperm.xlu0 %1843, %v1742
  %v1845 = vpop.permute.xlu0 %1844
  %1848 = vset.pattern.permute.xlu0 0
  %1849 = vperm.xlu0 %1848, %v1743
  %v1850 = vpop.permute.xlu0 %1849
  %1853 = vset.pattern.permute.xlu0 0
  %1854 = vperm.xlu0 %1853, %v1744
  %v1855 = vpop.permute.xlu0 %1854
  %1858 = vset.pattern.permute.xlu0 0
  %1859 = vperm.xlu0 %1858, %v1745
  %v1860 = vpop.permute.xlu0 %1859
  %1863 = vset.pattern.permute.xlu0 0
  %1864 = vperm.xlu0 %1863, %v1746
  %v1865 = vpop.permute.xlu0 %1864
  %1868 = vset.pattern.permute.xlu0 0
  %1869 = vperm.xlu0 %1868, %v1747
  %v1870 = vpop.permute.xlu0 %1869
  %1873 = vset.pattern.permute.xlu0 0
  %1874 = vperm.xlu0 %1873, %v1748
  %v1875 = vpop.permute.xlu0 %1874
  %1878 = vset.pattern.permute.xlu0 0
  %1879 = vperm.xlu0 %1878, %v1749
  %v1880 = vpop.permute.xlu0 %1879
  %1883 = vset.pattern.permute.xlu0 0
  %1884 = vperm.xlu0 %1883, %v1750
  %v1885 = vpop.permute.xlu0 %1884
  %1888 = vset.pattern.permute.xlu0 0
  %1889 = vperm.xlu0 %1888, %v1751
  %v1890 = vpop.permute.xlu0 %1889
  %1893 = vset.pattern.permute.xlu0 0
  %1894 = vperm.xlu0 %1893, %v1752
  %v1895 = vpop.permute.xlu0 %1894
  %1898 = vset.pattern.permute.xlu0 0
  %1899 = vperm.xlu0 %1898, %v1753
  %v1900 = vpop.permute.xlu0 %1899
  %1903 = vset.pattern.permute.xlu0 0
  %1904 = vperm.xlu0 %1903, %v1754
  %v1905 = vpop.permute.xlu0 %1904
  %1908 = vset.pattern.permute.xlu0 0
  %1909 = vperm.xlu0 %1908, %v1755
  %v1910 = vpop.permute.xlu0 %1909
  %1913 = vset.pattern.permute.xlu0 0
  %1914 = vperm.xlu0 %1913, %v1756
  %v1915 = vpop.permute.xlu0 %1914
  %v1981 = vunpack.c.l.b16 %v1661
  %v1982 = vunpack.c.h.b16 %v1661
  %v1983 = vunpack.c.l.b16 %v1662
  %v1984 = vunpack.c.h.b16 %v1662
  %v1985 = vunpack.c.l.b16 %v1663
  %v1986 = vunpack.c.h.b16 %v1663
  %v1987 = vunpack.c.l.b16 %v1664
  %v1988 = vunpack.c.h.b16 %v1664
  %v1989 = vunpack.c.l.b16 %v1665
  %v1990 = vunpack.c.h.b16 %v1665
  %v1991 = vunpack.c.l.b16 %v1666
  %v1992 = vunpack.c.h.b16 %v1666
  %v1993 = vunpack.c.l.b16 %v1667
  %v1994 = vunpack.c.h.b16 %v1667
  %v1995 = vunpack.c.l.b16 %v1668
  %v1996 = vunpack.c.h.b16 %v1668
  %v1997 = vunpack.c.l.b16 %v1669
  %v1998 = vunpack.c.h.b16 %v1669
  %v1999 = vunpack.c.l.b16 %v1670
  %v2000 = vunpack.c.h.b16 %v1670
  %v2001 = vunpack.c.l.b16 %v1671
  %v2002 = vunpack.c.h.b16 %v1671
  %v2003 = vunpack.c.l.b16 %v1672
  %v2004 = vunpack.c.h.b16 %v1672
  %v2005 = vunpack.c.l.b16 %v1673
  %v2006 = vunpack.c.h.b16 %v1673
  %v2007 = vunpack.c.l.b16 %v1674
  %v2008 = vunpack.c.h.b16 %v1674
  %v2009 = vunpack.c.l.b16 %v1675
  %v2010 = vunpack.c.h.b16 %v1675
  %v2011 = vunpack.c.l.b16 %v1676
  %v2012 = vunpack.c.h.b16 %v1676
  %v2013 = vunpack.c.l.b16 %v1677
  %v2014 = vunpack.c.h.b16 %v1677
  %v2015 = vunpack.c.l.b16 %v1678
  %v2016 = vunpack.c.h.b16 %v1678
  %v2017 = vunpack.c.l.b16 %v1679
  %v2018 = vunpack.c.h.b16 %v1679
  %v2019 = vunpack.c.l.b16 %v1680
  %v2020 = vunpack.c.h.b16 %v1680
  %v2021 = vunpack.c.l.b16 %v1681
  %v2022 = vunpack.c.h.b16 %v1681
  %v2023 = vunpack.c.l.b16 %v1682
  %v2024 = vunpack.c.h.b16 %v1682
  %v2025 = vunpack.c.l.b16 %v1683
  %v2026 = vunpack.c.h.b16 %v1683
  %v2027 = vunpack.c.l.b16 %v1684
  %v2028 = vunpack.c.h.b16 %v1684
  %v2029 = vunpack.c.l.b16 %v1685
  %v2030 = vunpack.c.h.b16 %v1685
  %v2031 = vunpack.c.l.b16 %v1686
  %v2032 = vunpack.c.h.b16 %v1686
  %v2033 = vunpack.c.l.b16 %v1687
  %v2034 = vunpack.c.h.b16 %v1687
  %v2035 = vunpack.c.l.b16 %v1688
  %v2036 = vunpack.c.h.b16 %v1688
  %v2037 = vunpack.c.l.b16 %v1689
  %v2038 = vunpack.c.h.b16 %v1689
  %v2039 = vunpack.c.l.b16 %v1690
  %v2040 = vunpack.c.h.b16 %v1690
  %v2041 = vunpack.c.l.b16 %v1691
  %v2042 = vunpack.c.h.b16 %v1691
  %v2043 = vunpack.c.l.b16 %v1692
  %v2044 = vunpack.c.h.b16 %v1692
  %v2045 = vunpack.c.l.b16 %v1693
  %v2046 = vunpack.c.h.b16 %v1693
  %v2047 = vunpack.c.l.b16 %v1694
  %v2048 = vunpack.c.h.b16 %v1694
  %v2049 = vunpack.c.l.b16 %v1695
  %v2050 = vunpack.c.h.b16 %v1695
  %v2051 = vunpack.c.l.b16 %v1696
  %v2052 = vunpack.c.h.b16 %v1696
  %v2053 = vunpack.c.l.b16 %v1697
  %v2054 = vunpack.c.h.b16 %v1697
  %v2055 = vunpack.c.l.b16 %v1698
  %v2056 = vunpack.c.h.b16 %v1698
  %v2057 = vunpack.c.l.b16 %v1699
  %v2058 = vunpack.c.h.b16 %v1699
  %v2059 = vunpack.c.l.b16 %v1700
  %v2060 = vunpack.c.h.b16 %v1700
  %v2061 = vunpack.c.l.b16 %v1701
  %v2062 = vunpack.c.h.b16 %v1701
  %v2063 = vunpack.c.l.b16 %v1702
  %v2064 = vunpack.c.h.b16 %v1702
  %v2065 = vunpack.c.l.b16 %v1703
  %v2066 = vunpack.c.h.b16 %v1703
  %v2067 = vunpack.c.l.b16 %v1704
  %v2068 = vunpack.c.h.b16 %v1704
  %v2069 = vunpack.c.l.b16 %v1705
  %v2070 = vunpack.c.h.b16 %v1705
  %v2071 = vunpack.c.l.b16 %v1706
  %v2072 = vunpack.c.h.b16 %v1706
  %v2073 = vunpack.c.l.b16 %v1707
  %v2074 = vunpack.c.h.b16 %v1707
  %v2075 = vunpack.c.l.b16 %v1708
  %v2076 = vunpack.c.h.b16 %v1708
  %v2077 = vunpack.c.l.b16 %v1709
  %v2078 = vunpack.c.h.b16 %v1709
  %v2079 = vunpack.c.l.b16 %v1710
  %v2080 = vunpack.c.h.b16 %v1710
  %v2081 = vunpack.c.l.b16 %v1711
  %v2082 = vunpack.c.h.b16 %v1711
  %v2083 = vunpack.c.l.b16 %v1712
  %v2084 = vunpack.c.h.b16 %v1712
  %v2085 = vunpack.c.l.b16 %v1713
  %v2086 = vunpack.c.h.b16 %v1713
  %v2087 = vunpack.c.l.b16 %v1714
  %v2088 = vunpack.c.h.b16 %v1714
  %v2089 = vunpack.c.l.b16 %v1715
  %v2090 = vunpack.c.h.b16 %v1715
  %v2091 = vunpack.c.l.b16 %v1716
  %v2092 = vunpack.c.h.b16 %v1716
  %v2093 = vunpack.c.l.b16 %v1717
  %v2094 = vunpack.c.h.b16 %v1717
  %v2095 = vunpack.c.l.b16 %v1718
  %v2096 = vunpack.c.h.b16 %v1718
  %v2097 = vunpack.c.l.b16 %v1719
  %v2098 = vunpack.c.h.b16 %v1719
  %v2099 = vunpack.c.l.b16 %v1720
  %v2100 = vunpack.c.h.b16 %v1720
  %v2101 = vunpack.c.l.b16 %v1721
  %v2102 = vunpack.c.h.b16 %v1721
  %v2103 = vunpack.c.l.b16 %v1722
  %v2104 = vunpack.c.h.b16 %v1722
  %v2105 = vunpack.c.l.b16 %v1723
  %v2106 = vunpack.c.h.b16 %v1723
  %v2107 = vunpack.c.l.b16 %v1724
  %v2108 = vunpack.c.h.b16 %v1724
  %v2109 = vpack.c.b16 %v1985, %v1981
  %v2110 = vpack.c.b16 %v1986, %v1982
  %v2111 = vpack.c.b16 %v1987, %v1983
  %v2112 = vpack.c.b16 %v1988, %v1984
  %v2113 = vpack.c.b16 %v1993, %v1989
  %v2114 = vpack.c.b16 %v1994, %v1990
  %v2115 = vpack.c.b16 %v1995, %v1991
  %v2116 = vpack.c.b16 %v1996, %v1992
  %v2117 = vpack.c.b16 %v2001, %v1997
  %v2118 = vpack.c.b16 %v2002, %v1998
  %v2119 = vpack.c.b16 %v2003, %v1999
  %v2120 = vpack.c.b16 %v2004, %v2000
  %v2121 = vpack.c.b16 %v2009, %v2005
  %v2122 = vpack.c.b16 %v2010, %v2006
  %v2123 = vpack.c.b16 %v2011, %v2007
  %v2124 = vpack.c.b16 %v2012, %v2008
  %v2125 = vpack.c.b16 %v2017, %v2013
  %v2126 = vpack.c.b16 %v2018, %v2014
  %v2127 = vpack.c.b16 %v2019, %v2015
  %v2128 = vpack.c.b16 %v2020, %v2016
  %v2129 = vpack.c.b16 %v2025, %v2021
  %v2130 = vpack.c.b16 %v2026, %v2022
  %v2131 = vpack.c.b16 %v2027, %v2023
  %v2132 = vpack.c.b16 %v2028, %v2024
  %v2133 = vpack.c.b16 %v2033, %v2029
  %v2134 = vpack.c.b16 %v2034, %v2030
  %v2135 = vpack.c.b16 %v2035, %v2031
  %v2136 = vpack.c.b16 %v2036, %v2032
  %v2137 = vpack.c.b16 %v2041, %v2037
  %v2138 = vpack.c.b16 %v2042, %v2038
  %v2139 = vpack.c.b16 %v2043, %v2039
  %v2140 = vpack.c.b16 %v2044, %v2040
  %v2141 = vpack.c.b16 %v2049, %v2045
  %v2142 = vpack.c.b16 %v2050, %v2046
  %v2143 = vpack.c.b16 %v2051, %v2047
  %v2144 = vpack.c.b16 %v2052, %v2048
  %v2145 = vpack.c.b16 %v2057, %v2053
  %v2146 = vpack.c.b16 %v2058, %v2054
  %v2147 = vpack.c.b16 %v2059, %v2055
  %v2148 = vpack.c.b16 %v2060, %v2056
  %v2149 = vpack.c.b16 %v2065, %v2061
  %v2150 = vpack.c.b16 %v2066, %v2062
  %v2151 = vpack.c.b16 %v2067, %v2063
  %v2152 = vpack.c.b16 %v2068, %v2064
  %v2153 = vpack.c.b16 %v2073, %v2069
  %v2154 = vpack.c.b16 %v2074, %v2070
  %v2155 = vpack.c.b16 %v2075, %v2071
  %v2156 = vpack.c.b16 %v2076, %v2072
  %v2157 = vpack.c.b16 %v2081, %v2077
  %v2158 = vpack.c.b16 %v2082, %v2078
  %v2159 = vpack.c.b16 %v2083, %v2079
  %v2160 = vpack.c.b16 %v2084, %v2080
  %v2161 = vpack.c.b16 %v2089, %v2085
  %v2162 = vpack.c.b16 %v2090, %v2086
  %v2163 = vpack.c.b16 %v2091, %v2087
  %v2164 = vpack.c.b16 %v2092, %v2088
  %v2165 = vpack.c.b16 %v2097, %v2093
  %v2166 = vpack.c.b16 %v2098, %v2094
  %v2167 = vpack.c.b16 %v2099, %v2095
  %v2168 = vpack.c.b16 %v2100, %v2096
  %v2169 = vpack.c.b16 %v2105, %v2101
  %v2170 = vpack.c.b16 %v2106, %v2102
  %v2171 = vpack.c.b16 %v2107, %v2103
  %v2172 = vpack.c.b16 %v2108, %v2104
  %2237 = vmatprep.subr.bf16.mxu0 0
  %2238 = vmatpush1.bf16.msra.mxu0 %v1636
  %2239 = vmatprep.subr.bf16.mxu0 0
  %2240 = vmatpush1.bf16.msra.mxu0 %v1635
  %2241 = vmatprep.subr.bf16.mxu0 0
  %2242 = vmatpush1.bf16.msra.mxu0 %v1634
  %2243 = vmatprep.subr.bf16.mxu0 0
  %2244 = vmatpush1.bf16.msra.mxu0 %v1633
  %2245 = vmatprep.subr.bf16.mxu0 0
  %2246 = vmatpush1.bf16.msra.mxu0 %v1632
  %2247 = vmatprep.subr.bf16.mxu0 0
  %2248 = vmatpush1.bf16.msra.mxu0 %v1631
  %2249 = vmatprep.subr.bf16.mxu0 0
  %2250 = vmatpush1.bf16.msra.mxu0 %v1630
  %2251 = vmatprep.subr.bf16.mxu0 0
  %2252 = vmatpush1.bf16.msra.mxu0 %v1629
  %2253 = vmatprep.subr.bf16.mxu0 0
  %2254 = vmatpush2.bf16.msra.mxu0 %v1644
  %2255 = vmatprep.subr.bf16.mxu0 0
  %2256 = vmatpush2.bf16.msra.mxu0 %v1643
  %2257 = vmatprep.subr.bf16.mxu0 0
  %2258 = vmatpush2.bf16.msra.mxu0 %v1642
  %2259 = vmatprep.subr.bf16.mxu0 0
  %2260 = vmatpush2.bf16.msra.mxu0 %v1641
  %2261 = vmatprep.subr.bf16.mxu0 0
  %2262 = vmatpush2.bf16.msra.mxu0 %v1640
  %2263 = vmatprep.subr.bf16.mxu0 0
  %2264 = vmatpush2.bf16.msra.mxu0 %v1639
  %2265 = vmatprep.subr.bf16.mxu0 0
  %2266 = vmatpush2.bf16.msra.mxu0 %v1638
  %2267 = vmatprep.subr.bf16.mxu0 0
  %2268 = vmatpush2.bf16.msra.mxu0 %v1637
  %2269 = vmatprep.mubr.bf16.mxu0 %v2110
  %2270 = vmatmul.mubr.bf16.gmra.mxu0 %v2109
  %v2271 = vpop.f32.mrf.mxu0
  %v2272 = vadd.f32 %v1760, %v2271
  %v2273 = vpop.f32.mrf.mxu0
  %v2274 = vpop.f32.mrf.mxu0
  %v2275 = vadd.f32 %v1765, %v2274
  %v2276 = vpop.f32.mrf.mxu0
  %2277 = vmatprep.mubr.bf16.mxu0 %v2114
  %2278 = vmatmul.mubr.bf16.gmra.mxu0 %v2113
  %v2279 = vpop.f32.mrf.mxu0
  %v2280 = vadd.f32 %v1770, %v2279
  %v2281 = vpop.f32.mrf.mxu0
  %v2282 = vpop.f32.mrf.mxu0
  %v2283 = vadd.f32 %v1775, %v2282
  %v2284 = vpop.f32.mrf.mxu0
  %2285 = vmatprep.mubr.bf16.mxu0 %v2118
  %2286 = vmatmul.mubr.bf16.gmra.mxu0 %v2117
  %v2287 = vpop.f32.mrf.mxu0
  %v2288 = vadd.f32 %v1780, %v2287
  %v2289 = vpop.f32.mrf.mxu0
  %v2290 = vpop.f32.mrf.mxu0
  %v2291 = vadd.f32 %v1785, %v2290
  %v2292 = vpop.f32.mrf.mxu0
  %2293 = vmatprep.mubr.bf16.mxu0 %v2122
  %2294 = vmatmul.mubr.bf16.gmra.mxu0 %v2121
  %v2295 = vpop.f32.mrf.mxu0
  %v2296 = vadd.f32 %v1790, %v2295
  %v2297 = vpop.f32.mrf.mxu0
  %v2298 = vpop.f32.mrf.mxu0
  %v2299 = vadd.f32 %v1795, %v2298
  %v2300 = vpop.f32.mrf.mxu0
  %2301 = vmatprep.mubr.bf16.mxu0 %v2126
  %2302 = vmatmul.mubr.bf16.gmra.mxu0 %v2125
  %v2303 = vpop.f32.mrf.mxu0
  %v2304 = vadd.f32 %v1800, %v2303
  %v2305 = vpop.f32.mrf.mxu0
  %v2306 = vpop.f32.mrf.mxu0
  %v2307 = vadd.f32 %v1805, %v2306
  %v2308 = vpop.f32.mrf.mxu0
  %2309 = vmatprep.mubr.bf16.mxu0 %v2130
  %2310 = vmatmul.mubr.bf16.gmra.mxu0 %v2129
  %v2311 = vpop.f32.mrf.mxu0
  %v2312 = vadd.f32 %v1810, %v2311
  %v2313 = vpop.f32.mrf.mxu0
  %v2314 = vpop.f32.mrf.mxu0
  %v2315 = vadd.f32 %v1815, %v2314
  %v2316 = vpop.f32.mrf.mxu0
  %2317 = vmatprep.mubr.bf16.mxu0 %v2134
  %2318 = vmatmul.mubr.bf16.gmra.mxu0 %v2133
  %v2319 = vpop.f32.mrf.mxu0
  %v2320 = vadd.f32 %v1820, %v2319
  %v2321 = vpop.f32.mrf.mxu0
  %v2322 = vpop.f32.mrf.mxu0
  %v2323 = vadd.f32 %v1825, %v2322
  %v2324 = vpop.f32.mrf.mxu0
  %2325 = vmatprep.mubr.bf16.mxu0 %v2138
  %2326 = vmatmul.mubr.bf16.gmra.mxu0 %v2137
  %v2327 = vpop.f32.mrf.mxu0
  %v2328 = vadd.f32 %v1830, %v2327
  %v2329 = vpop.f32.mrf.mxu0
  %v2330 = vpop.f32.mrf.mxu0
  %v2331 = vadd.f32 %v1835, %v2330
  %v2332 = vpop.f32.mrf.mxu0
  %2333 = vmatprep.mubr.bf16.mxu0 %v2142
  %2334 = vmatmul.mubr.bf16.gmra.mxu0 %v2141
  %v2335 = vpop.f32.mrf.mxu0
  %v2336 = vadd.f32 %v1840, %v2335
  %v2337 = vpop.f32.mrf.mxu0
  %v2338 = vpop.f32.mrf.mxu0
  %v2339 = vadd.f32 %v1845, %v2338
  %v2340 = vpop.f32.mrf.mxu0
  %2341 = vmatprep.mubr.bf16.mxu0 %v2146
  %2342 = vmatmul.mubr.bf16.gmra.mxu0 %v2145
  %v2343 = vpop.f32.mrf.mxu0
  %v2344 = vadd.f32 %v1850, %v2343
  %v2345 = vpop.f32.mrf.mxu0
  %v2346 = vpop.f32.mrf.mxu0
  %v2347 = vadd.f32 %v1855, %v2346
  %v2348 = vpop.f32.mrf.mxu0
  %2349 = vmatprep.mubr.bf16.mxu0 %v2150
  %2350 = vmatmul.mubr.bf16.gmra.mxu0 %v2149
  %v2351 = vpop.f32.mrf.mxu0
  %v2352 = vadd.f32 %v1860, %v2351
  %v2353 = vpop.f32.mrf.mxu0
  %v2354 = vpop.f32.mrf.mxu0
  %v2355 = vadd.f32 %v1865, %v2354
  %v2356 = vpop.f32.mrf.mxu0
  %2357 = vmatprep.mubr.bf16.mxu0 %v2154
  %2358 = vmatmul.mubr.bf16.gmra.mxu0 %v2153
  %v2359 = vpop.f32.mrf.mxu0
  %v2360 = vadd.f32 %v1870, %v2359
  %v2361 = vpop.f32.mrf.mxu0
  %v2362 = vpop.f32.mrf.mxu0
  %v2363 = vadd.f32 %v1875, %v2362
  %v2364 = vpop.f32.mrf.mxu0
  %2365 = vmatprep.mubr.bf16.mxu0 %v2158
  %2366 = vmatmul.mubr.bf16.gmra.mxu0 %v2157
  %v2367 = vpop.f32.mrf.mxu0
  %v2368 = vadd.f32 %v1880, %v2367
  %v2369 = vpop.f32.mrf.mxu0
  %v2370 = vpop.f32.mrf.mxu0
  %v2371 = vadd.f32 %v1885, %v2370
  %v2372 = vpop.f32.mrf.mxu0
  %2373 = vmatprep.mubr.bf16.mxu0 %v2162
  %2374 = vmatmul.mubr.bf16.gmra.mxu0 %v2161
  %v2375 = vpop.f32.mrf.mxu0
  %v2376 = vadd.f32 %v1890, %v2375
  %v2377 = vpop.f32.mrf.mxu0
  %v2378 = vpop.f32.mrf.mxu0
  %v2379 = vadd.f32 %v1895, %v2378
  %v2380 = vpop.f32.mrf.mxu0
  %2381 = vmatprep.mubr.bf16.mxu0 %v2166
  %2382 = vmatmul.mubr.bf16.gmra.mxu0 %v2165
  %v2383 = vpop.f32.mrf.mxu0
  %v2384 = vadd.f32 %v1900, %v2383
  %v2385 = vpop.f32.mrf.mxu0
  %v2386 = vpop.f32.mrf.mxu0
  %v2387 = vadd.f32 %v1905, %v2386
  %v2388 = vpop.f32.mrf.mxu0
  %2389 = vmatprep.mubr.bf16.mxu0 %v2170
  %2390 = vmatmul.mubr.bf16.gmra.mxu0 %v2169
  %v2391 = vpop.f32.mrf.mxu0
  %v2392 = vadd.f32 %v1910, %v2391
  %v2393 = vpop.f32.mrf.mxu0
  %v2394 = vpop.f32.mrf.mxu0
  %v2395 = vadd.f32 %v1915, %v2394
  %v2396 = vpop.f32.mrf.mxu0
  %2397 = vdwg.mxu0
  %2398 = vmatprep.subr.bf16.mxu0 0
  %2399 = vmatpush1.bf16.msra.mxu0 %v1652
  %2400 = vmatprep.subr.bf16.mxu0 0
  %2401 = vmatpush1.bf16.msra.mxu0 %v1651
  %2402 = vmatprep.subr.bf16.mxu0 0
  %2403 = vmatpush1.bf16.msra.mxu0 %v1650
  %2404 = vmatprep.subr.bf16.mxu0 0
  %2405 = vmatpush1.bf16.msra.mxu0 %v1649
  %2406 = vmatprep.subr.bf16.mxu0 0
  %2407 = vmatpush1.bf16.msra.mxu0 %v1648
  %2408 = vmatprep.subr.bf16.mxu0 0
  %2409 = vmatpush1.bf16.msra.mxu0 %v1647
  %2410 = vmatprep.subr.bf16.mxu0 0
  %2411 = vmatpush1.bf16.msra.mxu0 %v1646
  %2412 = vmatprep.subr.bf16.mxu0 0
  %2413 = vmatpush1.bf16.msra.mxu0 %v1645
  %2414 = vmatprep.subr.bf16.mxu0 0
  %2415 = vmatpush2.bf16.msra.mxu0 %v1660
  %2416 = vmatprep.subr.bf16.mxu0 0
  %2417 = vmatpush2.bf16.msra.mxu0 %v1659
  %2418 = vmatprep.subr.bf16.mxu0 0
  %2419 = vmatpush2.bf16.msra.mxu0 %v1658
  %2420 = vmatprep.subr.bf16.mxu0 0
  %2421 = vmatpush2.bf16.msra.mxu0 %v1657
  %2422 = vmatprep.subr.bf16.mxu0 0
  %2423 = vmatpush2.bf16.msra.mxu0 %v1656
  %2424 = vmatprep.subr.bf16.mxu0 0
  %2425 = vmatpush2.bf16.msra.mxu0 %v1655
  %2426 = vmatprep.subr.bf16.mxu0 0
  %2427 = vmatpush2.bf16.msra.mxu0 %v1654
  %2428 = vmatprep.subr.bf16.mxu0 0
  %2429 = vmatpush2.bf16.msra.mxu0 %v1653
  %2430 = vmatprep.mubr.bf16.mxu0 %v2112
  %2431 = vmatmul.mubr.bf16.gmra.mxu0 %v2111
  %v2432 = vpop.f32.mrf.mxu0
  %v2433 = vadd.f32 %v2272, %v2432
  %v2434 = vpop.f32.mrf.mxu0
  %v2435 = vpop.f32.mrf.mxu0
  %v2436 = vadd.f32 %v2275, %v2435
  %v2437 = vpop.f32.mrf.mxu0
  %2438 = vmatprep.mubr.bf16.mxu0 %v2116
  %2439 = vmatmul.mubr.bf16.gmra.mxu0 %v2115
  %v2440 = vpop.f32.mrf.mxu0
  %v2441 = vadd.f32 %v2280, %v2440
  %v2442 = vpop.f32.mrf.mxu0
  %v2443 = vpop.f32.mrf.mxu0
  %v2444 = vadd.f32 %v2283, %v2443
  %v2445 = vpop.f32.mrf.mxu0
  %2446 = vmatprep.mubr.bf16.mxu0 %v2120
  %2447 = vmatmul.mubr.bf16.gmra.mxu0 %v2119
  %v2448 = vpop.f32.mrf.mxu0
  %v2449 = vadd.f32 %v2288, %v2448
  %v2450 = vpop.f32.mrf.mxu0
  %v2451 = vpop.f32.mrf.mxu0
  %v2452 = vadd.f32 %v2291, %v2451
  %v2453 = vpop.f32.mrf.mxu0
  %2454 = vmatprep.mubr.bf16.mxu0 %v2124
  %2455 = vmatmul.mubr.bf16.gmra.mxu0 %v2123
  %v2456 = vpop.f32.mrf.mxu0
  %v2457 = vadd.f32 %v2296, %v2456
  %v2458 = vpop.f32.mrf.mxu0
  %v2459 = vpop.f32.mrf.mxu0
  %v2460 = vadd.f32 %v2299, %v2459
  %v2461 = vpop.f32.mrf.mxu0
  %2462 = vmatprep.mubr.bf16.mxu0 %v2128
  %2463 = vmatmul.mubr.bf16.gmra.mxu0 %v2127
  %v2464 = vpop.f32.mrf.mxu0
  %v2465 = vadd.f32 %v2304, %v2464
  %v2466 = vpop.f32.mrf.mxu0
  %v2467 = vpop.f32.mrf.mxu0
  %v2468 = vadd.f32 %v2307, %v2467
  %v2469 = vpop.f32.mrf.mxu0
  %2470 = vmatprep.mubr.bf16.mxu0 %v2132
  %2471 = vmatmul.mubr.bf16.gmra.mxu0 %v2131
  %v2472 = vpop.f32.mrf.mxu0
  %v2473 = vadd.f32 %v2312, %v2472
  %v2474 = vpop.f32.mrf.mxu0
  %v2475 = vpop.f32.mrf.mxu0
  %v2476 = vadd.f32 %v2315, %v2475
  %v2477 = vpop.f32.mrf.mxu0
  %2478 = vmatprep.mubr.bf16.mxu0 %v2136
  %2479 = vmatmul.mubr.bf16.gmra.mxu0 %v2135
  %v2480 = vpop.f32.mrf.mxu0
  %v2481 = vadd.f32 %v2320, %v2480
  %v2482 = vpop.f32.mrf.mxu0
  %v2483 = vpop.f32.mrf.mxu0
  %v2484 = vadd.f32 %v2323, %v2483
  %v2485 = vpop.f32.mrf.mxu0
  %2486 = vmatprep.mubr.bf16.mxu0 %v2140
  %2487 = vmatmul.mubr.bf16.gmra.mxu0 %v2139
  %v2488 = vpop.f32.mrf.mxu0
  %v2489 = vadd.f32 %v2328, %v2488
  %v2490 = vpop.f32.mrf.mxu0
  %v2491 = vpop.f32.mrf.mxu0
  %v2492 = vadd.f32 %v2331, %v2491
  %v2493 = vpop.f32.mrf.mxu0
  %2494 = vmatprep.mubr.bf16.mxu0 %v2144
  %2495 = vmatmul.mubr.bf16.gmra.mxu0 %v2143
  %v2496 = vpop.f32.mrf.mxu0
  %v2497 = vadd.f32 %v2336, %v2496
  %v2498 = vpop.f32.mrf.mxu0
  %v2499 = vpop.f32.mrf.mxu0
  %v2500 = vadd.f32 %v2339, %v2499
  %v2501 = vpop.f32.mrf.mxu0
  %2502 = vmatprep.mubr.bf16.mxu0 %v2148
  %2503 = vmatmul.mubr.bf16.gmra.mxu0 %v2147
  %v2504 = vpop.f32.mrf.mxu0
  %v2505 = vadd.f32 %v2344, %v2504
  %v2506 = vpop.f32.mrf.mxu0
  %v2507 = vpop.f32.mrf.mxu0
  %v2508 = vadd.f32 %v2347, %v2507
  %v2509 = vpop.f32.mrf.mxu0
  %2510 = vmatprep.mubr.bf16.mxu0 %v2152
  %2511 = vmatmul.mubr.bf16.gmra.mxu0 %v2151
  %v2512 = vpop.f32.mrf.mxu0
  %v2513 = vadd.f32 %v2352, %v2512
  %v2514 = vpop.f32.mrf.mxu0
  %v2515 = vpop.f32.mrf.mxu0
  %v2516 = vadd.f32 %v2355, %v2515
  %v2517 = vpop.f32.mrf.mxu0
  %2518 = vmatprep.mubr.bf16.mxu0 %v2156
  %2519 = vmatmul.mubr.bf16.gmra.mxu0 %v2155
  %v2520 = vpop.f32.mrf.mxu0
  %v2521 = vadd.f32 %v2360, %v2520
  %v2522 = vpop.f32.mrf.mxu0
  %v2523 = vpop.f32.mrf.mxu0
  %v2524 = vadd.f32 %v2363, %v2523
  %v2525 = vpop.f32.mrf.mxu0
  %2526 = vmatprep.mubr.bf16.mxu0 %v2160
  %2527 = vmatmul.mubr.bf16.gmra.mxu0 %v2159
  %v2528 = vpop.f32.mrf.mxu0
  %v2529 = vadd.f32 %v2368, %v2528
  %v2530 = vpop.f32.mrf.mxu0
  %v2531 = vpop.f32.mrf.mxu0
  %v2532 = vadd.f32 %v2371, %v2531
  %v2533 = vpop.f32.mrf.mxu0
  %2534 = vmatprep.mubr.bf16.mxu0 %v2164
  %2535 = vmatmul.mubr.bf16.gmra.mxu0 %v2163
  %v2536 = vpop.f32.mrf.mxu0
  %v2537 = vadd.f32 %v2376, %v2536
  %v2538 = vpop.f32.mrf.mxu0
  %v2539 = vpop.f32.mrf.mxu0
  %v2540 = vadd.f32 %v2379, %v2539
  %v2541 = vpop.f32.mrf.mxu0
  %2542 = vmatprep.mubr.bf16.mxu0 %v2168
  %2543 = vmatmul.mubr.bf16.gmra.mxu0 %v2167
  %v2544 = vpop.f32.mrf.mxu0
  %v2545 = vadd.f32 %v2384, %v2544
  %v2546 = vpop.f32.mrf.mxu0
  %v2547 = vpop.f32.mrf.mxu0
  %v2548 = vadd.f32 %v2387, %v2547
  %v2549 = vpop.f32.mrf.mxu0
  %2550 = vmatprep.mubr.bf16.mxu0 %v2172
  %2551 = vmatmul.mubr.bf16.gmra.mxu0 %v2171
  %v2552 = vpop.f32.mrf.mxu0
  %v2553 = vadd.f32 %v2392, %v2552
  %v2554 = vpop.f32.mrf.mxu0
  %v2555 = vpop.f32.mrf.mxu0
  %v2556 = vadd.f32 %v2395, %v2555
  %v2557 = vpop.f32.mrf.mxu0
  %2558 = vdwg.mxu0
  %v2559 = vmax.f32 %v2433, 0.0
  %v2560 = vmax.f32 %v2436, 0.0
  %v2561 = vmax.f32 %v2441, 0.0
  %v2562 = vmax.f32 %v2444, 0.0
  %v2563 = vmax.f32 %v2449, 0.0
  %v2564 = vmax.f32 %v2452, 0.0
  %v2565 = vmax.f32 %v2457, 0.0
  %v2566 = vmax.f32 %v2460, 0.0
  %v2567 = vmax.f32 %v2465, 0.0
  %v2568 = vmax.f32 %v2468, 0.0
  %v2569 = vmax.f32 %v2473, 0.0
  %v2570 = vmax.f32 %v2476, 0.0
  %v2571 = vmax.f32 %v2481, 0.0
  %v2572 = vmax.f32 %v2484, 0.0
  %v2573 = vmax.f32 %v2489, 0.0
  %v2574 = vmax.f32 %v2492, 0.0
  %v2575 = vmax.f32 %v2497, 0.0
  %v2576 = vmax.f32 %v2500, 0.0
  %v2577 = vmax.f32 %v2505, 0.0
  %v2578 = vmax.f32 %v2508, 0.0
  %v2579 = vmax.f32 %v2513, 0.0
  %v2580 = vmax.f32 %v2516, 0.0
  %v2581 = vmax.f32 %v2521, 0.0
  %v2582 = vmax.f32 %v2524, 0.0
  %v2583 = vmax.f32 %v2529, 0.0
  %v2584 = vmax.f32 %v2532, 0.0
  %v2585 = vmax.f32 %v2537, 0.0
  %v2586 = vmax.f32 %v2540, 0.0
  %v2587 = vmax.f32 %v2545, 0.0
  %v2588 = vmax.f32 %v2548, 0.0
  %v2589 = vmax.f32 %v2553, 0.0
  %v2590 = vmax.f32 %v2556, 0.0
  %v2591 = vpack.c.bf16 %v2560, %v2559
  %v2592 = vpack.c.bf16 %v2562, %v2561
  %v2593 = vpack.c.bf16 %v2564, %v2563
  %v2594 = vpack.c.bf16 %v2566, %v2565
  %v2595 = vpack.c.bf16 %v2568, %v2567
  %v2596 = vpack.c.bf16 %v2570, %v2569
  %v2597 = vpack.c.bf16 %v2572, %v2571
  %v2598 = vpack.c.bf16 %v2574, %v2573
  %v2599 = vpack.c.bf16 %v2576, %v2575
  %v2600 = vpack.c.bf16 %v2578, %v2577
  %v2601 = vpack.c.bf16 %v2580, %v2579
  %v2602 = vpack.c.bf16 %v2582, %v2581
  %v2603 = vpack.c.bf16 %v2584, %v2583
  %v2604 = vpack.c.bf16 %v2586, %v2585
  %v2605 = vpack.c.bf16 %v2588, %v2587
  %v2606 = vpack.c.bf16 %v2590, %v2589
  %v2607 = vld [vmem:[%s5] sm:$0xff]
  %v2608 = vld [vmem:[%s5 + $0x8] sm:$0xff]
  %v2609 = vld [vmem:[%s5 + $0x10] sm:$0x11]
  %v2610 = vld [vmem:[%s6] sm:$0xff]
  %v2611 = vld [vmem:[%s6 + $0x8] sm:$0xff]
  %v2612 = vld [vmem:[%s6 + $0x10] sm:$0x3]
  %2614 = vset.pattern.permute.xlu0 0
  %2615 = vperm.xlu0 %2614, %v2610
  %v2616 = vpop.permute.xlu0 %2615
  %2619 = vset.pattern.permute.xlu0 0
  %2620 = vperm.xlu0 %2619, %v2611
  %v2621 = vpop.permute.xlu0 %2620
  %2624 = vset.pattern.permute.xlu0 0
  %2625 = vperm.xlu0 %2624, %v2612
  %v2626 = vpop.permute.xlu0 %2625
  %v2631 = vunpack.c.l.b16 %v2607
  %v2632 = vunpack.c.h.b16 %v2607
  %v2633 = vunpack.c.l.b16 %v2608
  %v2634 = vunpack.c.h.b16 %v2608
  %v2635 = vunpack.c.l.b16 %v2609
  %v2636 = vunpack.c.h.b16 %v2609
  %v2637 = vpack.c.b16 %v2633, %v2631
  %v2638 = vpack.c.b16 %v2634, %v2632
  %v2639 = vpack.c.b16 %v2635, %v2635
  %v2640 = vpack.c.b16 %v2636, %v2636
  %2645 = vmatprep.subr.bf16.mxu0 0
  %2646 = vmatpush1.bf16.msra.mxu0 %v2598
  %2647 = vmatprep.subr.bf16.mxu0 0
  %2648 = vmatpush1.bf16.msra.mxu0 %v2597
  %2649 = vmatprep.subr.bf16.mxu0 0
  %2650 = vmatpush1.bf16.msra.mxu0 %v2596
  %2651 = vmatprep.subr.bf16.mxu0 0
  %2652 = vmatpush1.bf16.msra.mxu0 %v2595
  %2653 = vmatprep.subr.bf16.mxu0 0
  %2654 = vmatpush1.bf16.msra.mxu0 %v2594
  %2655 = vmatprep.subr.bf16.mxu0 0
  %2656 = vmatpush1.bf16.msra.mxu0 %v2593
  %2657 = vmatprep.subr.bf16.mxu0 0
  %2658 = vmatpush1.bf16.msra.mxu0 %v2592
  %2659 = vmatprep.subr.bf16.mxu0 0
  %2660 = vmatpush1.bf16.msra.mxu0 %v2591
  %2661 = vmatprep.subr.bf16.mxu0 0
  %2662 = vmatpush2.bf16.msra.mxu0 %v2606
  %2663 = vmatprep.subr.bf16.mxu0 0
  %2664 = vmatpush2.bf16.msra.mxu0 %v2605
  %2665 = vmatprep.subr.bf16.mxu0 0
  %2666 = vmatpush2.bf16.msra.mxu0 %v2604
  %2667 = vmatprep.subr.bf16.mxu0 0
  %2668 = vmatpush2.bf16.msra.mxu0 %v2603
  %2669 = vmatprep.subr.bf16.mxu0 0
  %2670 = vmatpush2.bf16.msra.mxu0 %v2602
  %2671 = vmatprep.subr.bf16.mxu0 0
  %2672 = vmatpush2.bf16.msra.mxu0 %v2601
  %2673 = vmatprep.subr.bf16.mxu0 0
  %2674 = vmatpush2.bf16.msra.mxu0 %v2600
  %2675 = vmatprep.subr.bf16.mxu0 0
  %2676 = vmatpush2.bf16.msra.mxu0 %v2599
  %2677 = vmatprep.mubr.bf16.mxu0 %v2638
  %2678 = vmatmul.mubr.bf16.gmra.mxu0 %v2637
  %v2679 = vpop.f32.mrf.mxu0
  %v2680 = vadd.f32 %v2616, %v2679
  %v2681 = vpop.f32.mrf.mxu0
  %v2682 = vpop.f32.mrf.mxu0
  %v2683 = vadd.f32 %v2621, %v2682
  %v2684 = vpop.f32.mrf.mxu0
  %2685 = vmatprep.mubr.bf16.mxu0 %v2640
  %2686 = vmatmul.mubr.bf16.gmra.mxu0 %v2639
  %v2687 = vpop.f32.mrf.mxu0
  %v2688 = vadd.f32 %v2626, %v2687
  %v2689 = vpop.f32.mrf.mxu0
  %v2690 = vpop.f32.mrf.mxu0
  %v2691 = vpop.f32.mrf.mxu0
  %2692 = vdwg.mxu0
  %v2693 = vmax.f32 %v2680, 0.0
  %v2694 = vmax.f32 %v2683, 0.0
  %v2695 = vmax.f32 %v2688, 0.0
  %2696 = vst [vmem:[%s7] sm:$0xff] %v2693
  %2697 = vst [vmem:[%s7 + $0x8] sm:$0xff] %v2694
  %2698 = vst [vmem:[%s7 + $0x10] sm:$0x3] %v2695
  // Predicated region
  $region30: #{tpu_custom_call.1} parent=0 // pred_check
    _
  $region31: #{tpu_custom_call.1} parent=0 // pred_check_branch
    %2700 = sbr.rel (0) target = $region33
  $region32: #{tpu_custom_call.1} parent=0 // pred_region
    _
  $region33: #{tpu_custom_call.1} parent=0 // pred_fallthru
    _
  // Predicated region
  $region34: #{tpu_custom_call.1} parent=0 // pred_check
    _
  $region35: #{tpu_custom_call.1} parent=0 // pred_check_branch
    %2702 = sbr.rel (0) target = $region37
  $region36: #{tpu_custom_call.1} parent=0 // pred_region
    _
  $region37: #{tpu_custom_call.1} parent=0 // pred_fallthru
    _

</llo_original>
